<compile_context>
chip_gen: v7x
topology: tpu7x:2x2x1
jax: 0.10.0
libtpu: 0.0.40
codegen_flags: <defaults>
</compile_context>

<pallas_src>
import jax
import jax.numpy as jnp
from jax import lax
from jax.experimental import pallas as pl
from jax.experimental.pallas import tpu as pltpu

CONFIG = {
    "env_name": "CarRacing-v0",
    "conv1": (4, 8, 4, 2),     # (cin, cout, kernel, stride)
    "conv2": (8, 16, 3, 2),
    "fc1": (144, 32),
    "fc2": (32, 4),
    "initial_weight_required": True,
}
IMG_HW = 16
IN_FEAT = CONFIG["conv1"][0] * IMG_HW * IMG_HW     # 1024 (already a lane multiple)
N_ACT = CONFIG["fc2"][1]                           # 4

# NOTE: batchNorm1/2/3 and conv3 are never instantiated under the CarRacing-v0
# config (and the forward's try/except skips them), so there is nothing to port.


# ---------------------------------------------------------------------------
# Fused Pallas kernel: whole forward for one batch tile
# ---------------------------------------------------------------------------
def _fused_policy_kernel(x_ref, m1_ref, b1_ref, m2_ref, b2_ref,
                         w3_ref, b3_ref, w4_ref, b4_ref, o_ref):
    m1 = m1_ref[...]
    wdt = m1.dtype                                  # bf16 fast path / f32 check path
    # conv1 (as dense GEMM) + bias + ReLU   (bf16 operands, f32 accumulation)
    h = jnp.dot(x_ref[...].astype(wdt), m1, preferred_element_type=jnp.float32)
    h = jnp.maximum(h + b1_ref[...], 0.0)
    # conv2 (as dense GEMM) + bias + ReLU
    h = jnp.dot(h.astype(wdt), m2_ref[...], preferred_element_type=jnp.float32)
    h = jnp.maximum(h + b2_ref[...], 0.0)
    # fc1 + bias + ReLU
    h = jnp.dot(h.astype(wdt), w3_ref[...], preferred_element_type=jnp.float32)
    h = jnp.maximum(h + b3_ref[...], 0.0)
    # fc2 + softmax over the 4 actions
    logits = jnp.dot(h.astype(wdt), w4_ref[...],
                     preferred_element_type=jnp.float32) + b4_ref[...]
    m = jnp.max(logits, axis=-1, keepdims=True)     # keeps garbage tail rows finite
    e = jnp.exp(logits - m)
    s = jnp.sum(e, axis=-1, keepdims=True)
    inv = pl.reciprocal(s, approx=True)             # EUP slot
    inv = inv * (2.0 - s * inv)                     # one Newton step -> ~f32 accuracy
    o_ref[...] = e * inv


# ---------------------------------------------------------------------------
# One-time parameter packing (done at init, NOT per forward)
# ---------------------------------------------------------------------------
def _round_up(x, m):
    return ((x + m - 1) // m) * m


def _conv_as_dense(w_oihw, cin, h, w, stride):
    """Dense (cin*h*w, cout*ho*wo) matrix equivalent to a VALID stride-s conv.

    Both sides use row-major (c, h, w) flattening, matching torch.flatten.
    """
    n_in = cin * h * w
    basis = jnp.eye(n_in, dtype=jnp.float32).reshape(n_in, cin, h, w)
    out = lax.conv_general_dilated(
        basis, w_oihw, (stride, stride), "VALID",
        dimension_numbers=("NCHW", "OIHW", "NCHW"))
    _, cout, ho, wo = out.shape
    return out.reshape(n_in, cout * ho * wo), (ho, wo)


def _pad2d(a, rows, cols):
    return jnp.pad(a, ((0, rows - a.shape[0]), (0, cols - a.shape[1])))


def _pad_bias(v, n):
    return jnp.pad(v, (0, n - v.shape[0]))[None, :]


def pack_params(params, dtype=jnp.bfloat16):
    """Pre-transform weights once.

    * convs -> (in, out) GEMM matrices, fcs transposed to (in, out)
    * feature dims zero-padded to multiples of 128 (392->512, 144->256, 32->128)
      so every GEMM / bias / ReLU is lane-dense (padded features stay exactly 0)
    * GEMM matrices stored in `dtype` (bf16 by default) for full MXU rate;
      biases stay f32 (added to f32 accumulators).
    """
    cin1, cout1, k1, s1 = CONFIG["conv1"]
    _, cout2, k2, s2 = CONFIG["conv2"]
    m1, (ho1, wo1) = _conv_as_dense(params["conv1_w"], cin1, IMG_HW, IMG_HW, s1)  # (1024, 392)
    m2, (ho2, wo2) = _conv_as_dense(params["conv2_w"], cout1, ho1, wo1, s2)       # (392, 144)
    w3 = params["fc1_w"].T                                                        # (144, 32)
    w4 = params["fc2_w"].T                                                        # (32, 4)
    b1 = jnp.repeat(params["conv1_b"], ho1 * wo1)                                 # (392,)
    b2 = jnp.repeat(params["conv2_b"], ho2 * wo2)                                 # (144,)

    f1 = _round_up(m1.shape[1], 128)    # 512
    f2 = _round_up(m2.shape[1], 128)    # 256
    f3 = _round_up(w3.shape[1], 128)    # 128

    return {
        "m1t": _pad2d(m1, IN_FEAT, f1).astype(dtype),   # (1024, 512)
        "b1":  _pad_bias(b1, f1),                       # (1, 512) f32
        "m2t": _pad2d(m2, f1, f2).astype(dtype),        # (512, 256)
        "b2":  _pad_bias(b2, f2),                       # (1, 256) f32
        "w3t": _pad2d(w3, f2, f3).astype(dtype),        # (256, 128)
        "b3":  _pad_bias(params["fc1_b"], f3),          # (1, 128) f32
        "w4t": _pad2d(w4, f3, N_ACT).astype(dtype),     # (128, 4)
        "b4":  params["fc2_b"][None, :],                # (1, 4)   f32
    }


# ---------------------------------------------------------------------------
# Forward wrapper: single pallas_call, 1-D parallel grid over batch tiles
# ---------------------------------------------------------------------------
@jax.jit
def sac_policy_forward(x_nchw, packed):
    """x_nchw: (B, 4, 16, 16) f32 -> per-sample action probabilities (B, 4)."""
    b = x_nchw.shape[0]
    xf = x_nchw.reshape(b, IN_FEAT)        # torch.flatten (c, h, w) order per row

    # Batch tile choice:
    #  * small batches: one full-extent block (always layout-legal, no padding)
    #  * large batches: big tiles (<=1024 rows) amortize the ~0.35us per-step
    #    overhead, while keeping >=2 grid steps so v7x shards over both TCs.
    #  * cap at 1024 rows so (tile + weights + temporaries) fits comfortably in
    #    the raised scoped-VMEM limit on all of v5e/v6e/v7x.
    if b <= 256:
        bt = b
    else:
        bt = min(1024, _round_up(pl.cdiv(b, 2), 8))
    grid = (pl.cdiv(b, bt),)               # ragged tail handled by edge-block masking

    weights = (packed["m1t"], packed["b1"], packed["m2t"], packed["b2"],
               packed["w3t"], packed["b3"], packed["w4t"], packed["b4"])
    # Weights map to block (0, 0) every step -> VMEM-resident across the grid.
    w_specs = [pl.BlockSpec(w.shape, lambda i: (0, 0)) for w in weights]

    w_bytes = sum(w.size * w.dtype.itemsize for w in weights)
    gemm_flops = 2 * b * sum(w.shape[0] * w.shape[1]
                             for w in (packed["m1t"], packed["m2t"],
                                       packed["w3t"], packed["w4t"]))
    cost = pl.CostEstimate(
        flops=gemm_flops,
        transcendentals=b * N_ACT,
        bytes_accessed=b * IN_FEAT * 4 + b * N_ACT * 4 + w_bytes,
    )

    out = pl.pallas_call(
        _fused_policy_kernel,
        out_shape=jax.ShapeDtypeStruct((b, N_ACT), jnp.float32),
        grid=grid,
        in_specs=[pl.BlockSpec((bt, IN_FEAT), lambda i: (i, 0))] + w_specs,
        out_specs=pl.BlockSpec((bt, N_ACT), lambda i: (i, 0)),
        compiler_params=pltpu.CompilerParams(
            dimension_semantics=("parallel",),          # shard batch tiles over TCs
            vmem_limit_bytes=32 * 1024 * 1024),         # v5e default (16 MiB) is tight
        cost_estimate=cost,
    )(xf, *weights)
    return out


# ---------------------------------------------------------------------------
# Parameter init (PyTorch-layout weights) and pure-JAX reference
# ---------------------------------------------------------------------------
def xavier_uniform(key, shape, fan_in, fan_out):
    lim = (6.0 / (fan_in + fan_out)) ** 0.5
    return jax.random.uniform(key, shape, jnp.float32, -lim, lim)


def init_params(key, config):
    cin1, cout1, k1, _ = config["conv1"]
    cin2, cout2, k2, _ = config["conv2"]
    f1_in, f1_out = config["fc1"]
    f2_in, f2_out = config["fc2"]
    ks = jax.random.split(key, 8)

    def bias(k, n, fan_in):
        lim = 1.0 / (fan_in ** 0.5)
        return jax.random.uniform(k, (n,), jnp.float32, -lim, lim)

    return {
        "conv1_w": xavier_uniform(ks[0], (cout1, cin1, k1, k1),
                                  cin1 * k1 * k1, cout1 * k1 * k1),
        "conv1_b": bias(ks[1], cout1, cin1 * k1 * k1),
        "conv2_w": xavier_uniform(ks[2], (cout2, cin2, k2, k2),
                                  cin2 * k2 * k2, cout2 * k2 * k2),
        "conv2_b": bias(ks[3], cout2, cin2 * k2 * k2),
        "fc1_w": xavier_uniform(ks[4], (f1_out, f1_in), f1_in, f1_out),
        "fc1_b": bias(ks[5], f1_out, f1_in),
        "fc2_w": xavier_uniform(ks[6], (f2_out, f2_in), f2_in, f2_out),
        "fc2_b": bias(ks[7], f2_out, f2_in),
    }


def reference_forward(x_nchw, params):
    """Pure-JAX reference reproducing the PyTorch forward (per sample)."""
    dn = ("NCHW", "OIHW", "NCHW")
    h = lax.conv_general_dilated(x_nchw, params["conv1_w"], (2, 2), "VALID",
                                 dimension_numbers=dn)
    h = jax.nn.relu(h + params["conv1_b"][None, :, None, None])
    h = lax.conv_general_dilated(h, params["conv2_w"], (2, 2), "VALID",
                                 dimension_numbers=dn)
    h = jax.nn.relu(h + params["conv2_b"][None, :, None, None])
    flat = h.reshape(h.shape[0], -1)                 # torch.flatten (c, h, w) order
    h = jax.nn.relu(flat @ params["fc1_w"].T + params["fc1_b"])
    logits = h @ params["fc2_w"].T + params["fc2_b"]
    return jax.nn.softmax(logits, axis=-1)


if __name__ == "__main__":
    key = jax.random.PRNGKey(0)
    k_param, k_x = jax.random.split(key)
    params = init_params(k_param, CONFIG)

    packed_bf16 = pack_params(params, dtype=jnp.bfloat16)   # production fast path
    packed_f32 = pack_params(params, dtype=jnp.float32)     # exactness check of packing

    # Small canonical shape implied by the module: (B, 4, 16, 16); f32 weights
    # validate the conv->GEMM packing / padding / softmax exactly.
    x_small = jax.random.normal(k_x, (2, CONFIG["conv1"][0], IMG_HW, IMG_HW),
                                jnp.float32)
    out_small = jax.block_until_ready(sac_policy_forward(x_small, packed_f32))
    ref_small = reference_forward(x_small, params)
    assert out_small.shape == (2, N_ACT)
    assert bool(jnp.all(jnp.isfinite(out_small)))
    assert jnp.allclose(out_small, ref_small, atol=1e-3, rtol=1e-3), \
        float(jnp.max(jnp.abs(out_small - ref_small)))

    # Larger ragged batch: exercises the multi-tile parallel grid, the unpadded
    # edge-block tail, and the bf16-weight MXU fast path.
    x_big = jax.random.normal(jax.random.PRNGKey(1),
                              (300, CONFIG["conv1"][0], IMG_HW, IMG_HW), jnp.float32)
    out_big = jax.block_until_ready(sac_policy_forward(x_big, packed_bf16))
    ref_big = reference_forward(x_big, params)
    assert out_big.shape == (300, N_ACT)
    assert bool(jnp.all(jnp.isfinite(out_big)))
    assert jnp.allclose(jnp.sum(out_big, axis=-1), 1.0, atol=1e-3)
    assert jnp.allclose(out_big, ref_big, atol=2e-2, rtol=2e-2), \
        float(jnp.max(jnp.abs(out_big - ref_big)))

    print("KERNEL_OK")
</pallas_src>

<mosaic_0001>
module attributes {stable_mosaic.version = 11 : i64} {
  func.func @_fused_policy_kernel(%arg0: i32, %arg1: memref<2x1024xf32, #tpu.memory_space<vmem>>, %arg2: memref<1024x512xf32, #tpu.memory_space<vmem>>, %arg3: memref<1x512xf32, #tpu.memory_space<vmem>>, %arg4: memref<512x256xf32, #tpu.memory_space<vmem>>, %arg5: memref<1x256xf32, #tpu.memory_space<vmem>>, %arg6: memref<256x128xf32, #tpu.memory_space<vmem>>, %arg7: memref<1x128xf32, #tpu.memory_space<vmem>>, %arg8: memref<128x4xf32, #tpu.memory_space<vmem>>, %arg9: memref<1x4xf32, #tpu.memory_space<vmem>>, %arg10: memref<2x4xf32, #tpu.memory_space<vmem>>) attributes {dimension_semantics = [#tpu.dimension_semantics<parallel>], iteration_bounds = array<i64: 1>, scalar_prefetch = 0 : i64, scratch_operands = 0 : i64, tpu.core_type = #tpu.core_type<tc>, window_params = [{transform_indices = @transform_0, window_bounds = array<i64: 2, 1024>}, {pipeline_mode = #tpu.pipeline_mode<synchronous>, transform_indices = @transform_1, window_bounds = array<i64: 1024, 512>}, {pipeline_mode = #tpu.pipeline_mode<synchronous>, transform_indices = @transform_2, window_bounds = array<i64: 1, 512>}, {pipeline_mode = #tpu.pipeline_mode<synchronous>, transform_indices = @transform_3, window_bounds = array<i64: 512, 256>}, {pipeline_mode = #tpu.pipeline_mode<synchronous>, transform_indices = @transform_4, window_bounds = array<i64: 1, 256>}, {pipeline_mode = #tpu.pipeline_mode<synchronous>, transform_indices = @transform_5, window_bounds = array<i64: 256, 128>}, {pipeline_mode = #tpu.pipeline_mode<synchronous>, transform_indices = @transform_6, window_bounds = array<i64: 1, 128>}, {pipeline_mode = #tpu.pipeline_mode<synchronous>, transform_indices = @transform_7, window_bounds = array<i64: 128, 4>}, {pipeline_mode = #tpu.pipeline_mode<synchronous>, transform_indices = @transform_8, window_bounds = array<i64: 1, 4>}, {transform_indices = @transform_9, window_bounds = array<i64: 2, 4>}]} {
    %c0 = arith.constant 0 : index
    %c0_0 = arith.constant 0 : index
    %0 = vector.load %arg2[%c0, %c0_0] : memref<1024x512xf32, #tpu.memory_space<vmem>>, vector<1024x512xf32>
    %c0_1 = arith.constant 0 : index
    %c0_2 = arith.constant 0 : index
    %1 = vector.load %arg1[%c0_1, %c0_2] : memref<2x1024xf32, #tpu.memory_space<vmem>>, vector<2x1024xf32>
    %cst = arith.constant dense<0.000000e+00> : vector<2x512xf32>
    %2 = tpu.matmul %1, %0, %cst {dimension_numbers = #tpu.dot_dimension_numbers<[1], [0], [0], [1], [0, 0, 1, 1], [], []>} : vector<2x1024xf32>, vector<1024x512xf32>, vector<2x512xf32> -> vector<2x512xf32>
    %c0_3 = arith.constant 0 : index
    %c0_4 = arith.constant 0 : index
    %3 = vector.load %arg3[%c0_3, %c0_4] : memref<1x512xf32, #tpu.memory_space<vmem>>, vector<1x512xf32>
    %4 = vector.broadcast %3 : vector<1x512xf32> to vector<2x512xf32>
    %5 = arith.addf %2, %4 : vector<2x512xf32>
    %cst_5 = arith.constant 0.000000e+00 : f32
    %6 = vector.broadcast %cst_5 : f32 to vector<2x512xf32>
    %7 = arith.maximumf %5, %6 : vector<2x512xf32>
    %c0_6 = arith.constant 0 : index
    %c0_7 = arith.constant 0 : index
    %8 = vector.load %arg4[%c0_6, %c0_7] : memref<512x256xf32, #tpu.memory_space<vmem>>, vector<512x256xf32>
    %cst_8 = arith.constant dense<0.000000e+00> : vector<2x256xf32>
    %9 = tpu.matmul %7, %8, %cst_8 {dimension_numbers = #tpu.dot_dimension_numbers<[1], [0], [0], [1], [0, 0, 1, 1], [], []>} : vector<2x512xf32>, vector<512x256xf32>, vector<2x256xf32> -> vector<2x256xf32>
    %c0_9 = arith.constant 0 : index
    %c0_10 = arith.constant 0 : index
    %10 = vector.load %arg5[%c0_9, %c0_10] : memref<1x256xf32, #tpu.memory_space<vmem>>, vector<1x256xf32>
    %11 = vector.broadcast %10 : vector<1x256xf32> to vector<2x256xf32>
    %12 = arith.addf %9, %11 : vector<2x256xf32>
    %cst_11 = arith.constant 0.000000e+00 : f32
    %13 = vector.broadcast %cst_11 : f32 to vector<2x256xf32>
    %14 = arith.maximumf %12, %13 : vector<2x256xf32>
    %c0_12 = arith.constant 0 : index
    %c0_13 = arith.constant 0 : index
    %15 = vector.load %arg6[%c0_12, %c0_13] : memref<256x128xf32, #tpu.memory_space<vmem>>, vector<256x128xf32>
    %cst_14 = arith.constant dense<0.000000e+00> : vector<2x128xf32>
    %16 = tpu.matmul %14, %15, %cst_14 {dimension_numbers = #tpu.dot_dimension_numbers<[1], [0], [0], [1], [0, 0, 1, 1], [], []>} : vector<2x256xf32>, vector<256x128xf32>, vector<2x128xf32> -> vector<2x128xf32>
    %c0_15 = arith.constant 0 : index
    %c0_16 = arith.constant 0 : index
    %17 = vector.load %arg7[%c0_15, %c0_16] : memref<1x128xf32, #tpu.memory_space<vmem>>, vector<1x128xf32>
    %18 = vector.broadcast %17 : vector<1x128xf32> to vector<2x128xf32>
    %19 = arith.addf %16, %18 : vector<2x128xf32>
    %cst_17 = arith.constant 0.000000e+00 : f32
    %20 = vector.broadcast %cst_17 : f32 to vector<2x128xf32>
    %21 = arith.maximumf %19, %20 : vector<2x128xf32>
    %c0_18 = arith.constant 0 : index
    %c0_19 = arith.constant 0 : index
    %22 = vector.load %arg8[%c0_18, %c0_19] : memref<128x4xf32, #tpu.memory_space<vmem>>, vector<128x4xf32>
    %cst_20 = arith.constant dense<0.000000e+00> : vector<2x4xf32>
    %23 = tpu.matmul %21, %22, %cst_20 {dimension_numbers = #tpu.dot_dimension_numbers<[1], [0], [0], [1], [0, 0, 1, 1], [], []>} : vector<2x128xf32>, vector<128x4xf32>, vector<2x4xf32> -> vector<2x4xf32>
    %c0_21 = arith.constant 0 : index
    %c0_22 = arith.constant 0 : index
    %24 = vector.load %arg9[%c0_21, %c0_22] : memref<1x4xf32, #tpu.memory_space<vmem>>, vector<1x4xf32>
    %25 = vector.broadcast %24 : vector<1x4xf32> to vector<2x4xf32>
    %26 = arith.addf %23, %25 : vector<2x4xf32>
    %cst_23 = arith.constant dense<0xFF800000> : vector<2xf32>
    %27 = vector.multi_reduction <maximumf>, %26, %cst_23 [1] : vector<2x4xf32> to vector<2xf32>
    %28 = vector.shape_cast %27 : vector<2xf32> to vector<2x1xf32>
    %29 = vector.broadcast %28 : vector<2x1xf32> to vector<2x4xf32>
    %30 = arith.subf %26, %29 : vector<2x4xf32>
    %31 = math.exp %30 : vector<2x4xf32>
    %cst_24 = arith.constant dense<0.000000e+00> : vector<2xf32>
    %32 = vector.multi_reduction <add>, %31, %cst_24 [1] : vector<2x4xf32> to vector<2xf32>
    %33 = vector.shape_cast %32 : vector<2xf32> to vector<2x1xf32>
    %34 = tpu.reciprocal %33 {approx = true} : vector<2x1xf32> -> vector<2x1xf32>
    %35 = arith.mulf %33, %34 : vector<2x1xf32>
    %cst_25 = arith.constant 2.000000e+00 : f32
    %36 = vector.broadcast %cst_25 : f32 to vector<2x1xf32>
    %37 = arith.subf %36, %35 : vector<2x1xf32>
    %38 = arith.mulf %34, %37 : vector<2x1xf32>
    %39 = vector.broadcast %38 : vector<2x1xf32> to vector<2x4xf32>
    %40 = arith.mulf %31, %39 : vector<2x4xf32>
    %c0_26 = arith.constant 0 : index
    %c0_27 = arith.constant 0 : index
    %41 = vector.load %arg10[%c0_26, %c0_27] : memref<2x4xf32, #tpu.memory_space<vmem>>, vector<2x4xf32>
    tpu.vector_store %arg10[%c0_26, %c0_27], %40 {strides = array<i32>} : memref<2x4xf32, #tpu.memory_space<vmem>>, vector<2x4xf32>,
    return
  }
  func.func @transform_0(%arg0: i32) -> (i32, i32) {
    %c0_i32 = arith.constant 0 : i32
    %c0_i32_0 = arith.constant 0 : i32
    return %arg0, %c0_i32 : i32, i32
  }
  func.func @transform_1(%arg0: i32) -> (i32, i32) {
    %c0_i32 = arith.constant 0 : i32
    %c0_i32_0 = arith.constant 0 : i32
    %c0_i32_1 = arith.constant 0 : i32
    return %c0_i32, %c0_i32_0 : i32, i32
  }
  func.func @transform_2(%arg0: i32) -> (i32, i32) {
    %c0_i32 = arith.constant 0 : i32
    %c0_i32_0 = arith.constant 0 : i32
    %c0_i32_1 = arith.constant 0 : i32
    return %c0_i32, %c0_i32_0 : i32, i32
  }
  func.func @transform_3(%arg0: i32) -> (i32, i32) {
    %c0_i32 = arith.constant 0 : i32
    %c0_i32_0 = arith.constant 0 : i32
    %c0_i32_1 = arith.constant 0 : i32
    return %c0_i32, %c0_i32_0 : i32, i32
  }
  func.func @transform_4(%arg0: i32) -> (i32, i32) {
    %c0_i32 = arith.constant 0 : i32
    %c0_i32_0 = arith.constant 0 : i32
    %c0_i32_1 = arith.constant 0 : i32
    return %c0_i32, %c0_i32_0 : i32, i32
  }
  func.func @transform_5(%arg0: i32) -> (i32, i32) {
    %c0_i32 = arith.constant 0 : i32
    %c0_i32_0 = arith.constant 0 : i32
    %c0_i32_1 = arith.constant 0 : i32
    return %c0_i32, %c0_i32_0 : i32, i32
  }
  func.func @transform_6(%arg0: i32) -> (i32, i32) {
    %c0_i32 = arith.constant 0 : i32
    %c0_i32_0 = arith.constant 0 : i32
    %c0_i32_1 = arith.constant 0 : i32
    return %c0_i32, %c0_i32_0 : i32, i32
  }
  func.func @transform_7(%arg0: i32) -> (i32, i32) {
    %c0_i32 = arith.constant 0 : i32
    %c0_i32_0 = arith.constant 0 : i32
    %c0_i32_1 = arith.constant 0 : i32
    return %c0_i32, %c0_i32_0 : i32, i32
  }
  func.func @transform_8(%arg0: i32) -> (i32, i32) {
    %c0_i32 = arith.constant 0 : i32
    %c0_i32_0 = arith.constant 0 : i32
    %c0_i32_1 = arith.constant 0 : i32
    return %c0_i32, %c0_i32_0 : i32, i32
  }
  func.func @transform_9(%arg0: i32) -> (i32, i32) {
    %c0_i32 = arith.constant 0 : i32
    %c0_i32_0 = arith.constant 0 : i32
    return %arg0, %c0_i32 : i32, i32
  }
}

</mosaic_0001>

<llo_original>
// kernel: sac_policy_forward.1
$region0: #{sac_policy_forward.1}
  #allocation0 [shape = 'u32[]', space=smem, size = 0x4, offset = 0x4, fixed_abs, tag = 'smem constant byte address 0x4 - core index']
  #allocation1 [shape = 'u32[144,128]{1,0:T(1,128)}', space=vmem, size = 0x12000, scoped, tag = 'internal scratch']
  %s0 = inlined_call_operand.vmem [shape: f32[2,1024], index: 0, kind: input, shape index: {}]
  %s1 = inlined_call_operand.hbm [shape: f32[1024,512], index: 1, kind: input, shape index: {}]
  %s2 = inlined_call_operand.hbm [shape: f32[1,512], index: 2, kind: input, shape index: {}]
  %s3 = inlined_call_operand.hbm [shape: f32[512,256], index: 3, kind: input, shape index: {}]
  %s4 = inlined_call_operand.hbm [shape: f32[1,256], index: 4, kind: input, shape index: {}]
  %s5 = inlined_call_operand.hbm [shape: f32[256,128], index: 5, kind: input, shape index: {}]
  %s6 = inlined_call_operand.hbm [shape: f32[1,128], index: 6, kind: input, shape index: {}]
  %s7 = inlined_call_operand.vmem [shape: f32[128,4], index: 7, kind: input, shape index: {}]
  %s8 = inlined_call_operand.hbm [shape: f32[1,4], index: 8, kind: input, shape index: {}]
  %s9 = inlined_call_operand.hbm [shape: f32[2,4], index: 9, kind: output, shape index: {}]
  %s10 = sld [smem:[#allocation0]]
  $region74: #{sac_policy_forward.1} parent=0
    _
  %s12 = ssub.s32 1, %s10
  %s13 = scalar_select 0, %s12, %s10
  $region1: #{sac_policy_forward.1} parent=0
    #allocation2 [shape = 'u8[2097152]{0}', space=vmem, size = 0x200000, scoped, tag = 'input window, operand 1, single buffered']
    #allocation3 [shape = 's32[1]{0}', space=sflag, size = 0x4, scoped, tag = 'scoped memory for sac_policy_forward.1']
    #allocation4 [shape = 's32[1]{0}', space=sflag, size = 0x4, scoped, tag = 'scoped memory for sac_policy_forward.1']
    #allocation5 [shape = 'u8[2048]{0}', space=vmem, size = 0x800, scoped, tag = 'input window, operand 2, single buffered']
    #allocation6 [shape = 's32[1]{0}', space=sflag, size = 0x4, scoped, tag = 'scoped memory for sac_policy_forward.1']
    #allocation7 [shape = 'u8[524288]{0}', space=vmem, size = 0x80000, scoped, tag = 'input window, operand 3, single buffered']
    #allocation8 [shape = 'u8[1024]{0}', space=vmem, size = 0x400, scoped, tag = 'input window, operand 4, single buffered']
    #allocation9 [shape = 's32[1]{0}', space=sflag, size = 0x4, scoped, tag = 'scoped memory for sac_policy_forward.1']
    #allocation10 [shape = 'u8[131072]{0}', space=vmem, size = 0x20000, scoped, tag = 'input window, operand 5, single buffered']
    #allocation11 [shape = 'u8[512]{0}', space=vmem, size = 0x400, scoped, tag = 'input window, operand 6, single buffered']
    #allocation12 [shape = 's32[1]{0}', space=sflag, size = 0x4, scoped, tag = 'scoped memory for sac_policy_forward.1']
    #allocation13 [shape = 'u8[512]{0}', space=vmem, size = 0x400, scoped, tag = 'input window, operand 8, single buffered']
    #allocation14 [shape = 'u8[1024]{0}', space=vmem, size = 0x400, scoped, tag = 'output window, operand 0, single buffered']
    %14 = vsyncpa [#allocation3], 0
    %15 = vsyncpa [#allocation6], 0
    %16 = vsyncpa [#allocation9], 0
    %17 = vsyncpa [#allocation12], 0
    %18 = vsyncpa [#allocation4], 0
    // Predicated region
    $region2: #{sac_policy_forward.1} parent=1 // pred_check
      _
    $region3: #{sac_policy_forward.1} parent=1 // pred_check_branch
      %20 = sbr.rel (0) target = $region5
    $region4: #{sac_policy_forward.1} parent=1 // pred_region
      _
    $region5: #{sac_policy_forward.1} parent=1 // pred_fallthru
      _
    // Predicated region
    $region6: #{sac_policy_forward.1} parent=1 // pred_check
      _
    $region7: #{sac_policy_forward.1} parent=1 // pred_check_branch
      %22 = sbr.rel (0) target = $region9
    $region8: #{sac_policy_forward.1} parent=1 // pred_region
      %s24 = ssub.s32 65536, 65536
      %25 = vsyncadd [#allocation3], %s24
      %s26 = sshll.u32 [#allocation2], 4
      %s27 = int_to_ptr.vmem [resolvable:$true] %s26
      %32 = dma.hbm_to_vmem [thread:$0]  %s1, 65536, %s27, [#allocation3], 512, 512, 32
    $region9: #{sac_policy_forward.1} parent=1 // pred_fallthru
      _
    // Predicated region
    $region10: #{sac_policy_forward.1} parent=1 // pred_check
      _
    $region11: #{sac_policy_forward.1} parent=1 // pred_check_branch
      %34 = sbr.rel (0) target = $region13
    $region12: #{sac_policy_forward.1} parent=1 // pred_region
      %s36 = ssub.s32 64, 64
      %37 = vsyncadd [#allocation6], %s36
      %s39 = sshll.u32 [#allocation5], 4
      %s40 = int_to_ptr.vmem [resolvable:$true] %s39
      %42 = dma.hbm_to_vmem [thread:$0]  %s2, 64, %s40, [#allocation6]
    $region13: #{sac_policy_forward.1} parent=1 // pred_fallthru
      _
    // Predicated region
    $region14: #{sac_policy_forward.1} parent=1 // pred_check
      _
    $region15: #{sac_policy_forward.1} parent=1 // pred_check_branch
      %44 = sbr.rel (0) target = $region17
    $region16: #{sac_policy_forward.1} parent=1 // pred_region
      %s46 = ssub.s32 16384, 16384
      %47 = vsyncadd [#allocation6], %s46
      %s48 = sshll.u32 [#allocation7], 4
      %s49 = int_to_ptr.vmem [resolvable:$true] %s48
      %54 = dma.hbm_to_vmem [thread:$0]  %s3, 16384, %s49, [#allocation6], 256, 256, 16
    $region17: #{sac_policy_forward.1} parent=1 // pred_fallthru
      _
    // Predicated region
    $region18: #{sac_policy_forward.1} parent=1 // pred_check
      _
    $region19: #{sac_policy_forward.1} parent=1 // pred_check_branch
      %56 = sbr.rel (0) target = $region21
    $region20: #{sac_policy_forward.1} parent=1 // pred_region
      %s58 = ssub.s32 32, 32
      %59 = vsyncadd [#allocation9], %s58
      %s61 = sshll.u32 [#allocation8], 4
      %s62 = int_to_ptr.vmem [resolvable:$true] %s61
      %64 = dma.hbm_to_vmem [thread:$0]  %s4, 32, %s62, [#allocation9]
    $region21: #{sac_policy_forward.1} parent=1 // pred_fallthru
      _
    // Predicated region
    $region22: #{sac_policy_forward.1} parent=1 // pred_check
      _
    $region23: #{sac_policy_forward.1} parent=1 // pred_check_branch
      %66 = sbr.rel (0) target = $region25
    $region24: #{sac_policy_forward.1} parent=1 // pred_region
      %s68 = ssub.s32 4096, 4096
      %69 = vsyncadd [#allocation9], %s68
      %s70 = sshll.u32 [#allocation10], 4
      %s71 = int_to_ptr.vmem [resolvable:$true] %s70
      %76 = dma.hbm_to_vmem [thread:$0]  %s5, 4096, %s71, [#allocation9], 128, 128, 8
    $region25: #{sac_policy_forward.1} parent=1 // pred_fallthru
      _
    // Predicated region
    $region26: #{sac_policy_forward.1} parent=1 // pred_check
      _
    $region27: #{sac_policy_forward.1} parent=1 // pred_check_branch
      %78 = sbr.rel (0) target = $region29
    $region28: #{sac_policy_forward.1} parent=1 // pred_region
      %s80 = ssub.s32 16, 16
      %81 = vsyncadd [#allocation12], %s80
      %s83 = sshll.u32 [#allocation11], 4
      %s84 = int_to_ptr.vmem [resolvable:$true] %s83
      %86 = dma.hbm_to_vmem [thread:$0]  %s6, 16, %s84, [#allocation12]
    $region29: #{sac_policy_forward.1} parent=1 // pred_fallthru
      _
    // Predicated region
    $region30: #{sac_policy_forward.1} parent=1 // pred_check
      _
    $region31: #{sac_policy_forward.1} parent=1 // pred_check_branch
      %88 = sbr.rel (0) target = $region33
    $region32: #{sac_policy_forward.1} parent=1 // pred_region
      _
    $region33: #{sac_policy_forward.1} parent=1 // pred_fallthru
      _
    // Predicated region
    $region34: #{sac_policy_forward.1} parent=1 // pred_check
      _
    $region35: #{sac_policy_forward.1} parent=1 // pred_check_branch
      %90 = sbr.rel (0) target = $region37
    $region36: #{sac_policy_forward.1} parent=1 // pred_region
      %s92 = ssub.s32 16, 16
      %93 = vsyncadd [#allocation12], %s92
      %s95 = sshll.u32 [#allocation13], 4
      %s96 = int_to_ptr.vmem [resolvable:$true] %s95
      %98 = dma.hbm_to_vmem [thread:$0]  %s8, 16, %s96, [#allocation12]
    $region37: #{sac_policy_forward.1} parent=1 // pred_fallthru
      _
    // Predicated region
    $region38: #{sac_policy_forward.1} parent=1 // pred_check
      _
    $region39: #{sac_policy_forward.1} parent=1 // pred_check_branch
      %100 = sbr.rel (0) target = $region41
    $region40: #{sac_policy_forward.1} parent=1 // pred_region
      %101 = dma.done [#allocation3], 65536
    $region41: #{sac_policy_forward.1} parent=1 // pred_fallthru
      _
    // Predicated region
    $region42: #{sac_policy_forward.1} parent=1 // pred_check
      _
    $region43: #{sac_policy_forward.1} parent=1 // pred_check_branch
      %103 = sbr.rel (0) target = $region45
    $region44: #{sac_policy_forward.1} parent=1 // pred_region
      %104 = dma.done [#allocation6], 64
    $region45: #{sac_policy_forward.1} parent=1 // pred_fallthru
      _
    // Predicated region
    $region46: #{sac_policy_forward.1} parent=1 // pred_check
      _
    $region47: #{sac_policy_forward.1} parent=1 // pred_check_branch
      %106 = sbr.rel (0) target = $region49
    $region48: #{sac_policy_forward.1} parent=1 // pred_region
      %107 = dma.done [#allocation6], 16384
    $region49: #{sac_policy_forward.1} parent=1 // pred_fallthru
      _
    // Predicated region
    $region50: #{sac_policy_forward.1} parent=1 // pred_check
      _
    $region51: #{sac_policy_forward.1} parent=1 // pred_check_branch
      %109 = sbr.rel (0) target = $region53
    $region52: #{sac_policy_forward.1} parent=1 // pred_region
      %110 = dma.done [#allocation9], 32
    $region53: #{sac_policy_forward.1} parent=1 // pred_fallthru
      _
    // Predicated region
    $region54: #{sac_policy_forward.1} parent=1 // pred_check
      _
    $region55: #{sac_policy_forward.1} parent=1 // pred_check_branch
      %112 = sbr.rel (0) target = $region57
    $region56: #{sac_policy_forward.1} parent=1 // pred_region
      %113 = dma.done [#allocation9], 4096
    $region57: #{sac_policy_forward.1} parent=1 // pred_fallthru
      _
    // Predicated region
    $region58: #{sac_policy_forward.1} parent=1 // pred_check
      _
    $region59: #{sac_policy_forward.1} parent=1 // pred_check_branch
      %115 = sbr.rel (0) target = $region61
    $region60: #{sac_policy_forward.1} parent=1 // pred_region
      %116 = dma.done [#allocation12], 16
    $region61: #{sac_policy_forward.1} parent=1 // pred_fallthru
      _
    // Predicated region
    $region62: #{sac_policy_forward.1} parent=1 // pred_check
      _
    $region63: #{sac_policy_forward.1} parent=1 // pred_check_branch
      %118 = sbr.rel (0) target = $region65
    $region64: #{sac_policy_forward.1} parent=1 // pred_region
      %119 = dma.done [#allocation12], 16
    $region65: #{sac_policy_forward.1} parent=1 // pred_fallthru
      _
    %v120 = vld [vmem:[#allocation2] sm:$0xff]
    %v121 = vld [vmem:[#allocation2 + $0x8] sm:$0xff]
    %v122 = vld [vmem:[#allocation2 + $0x10] sm:$0xff]
    %v123 = vld [vmem:[#allocation2 + $0x18] sm:$0xff]
    %v124 = vld [vmem:[#allocation2 + $0x20] sm:$0xff]
    %v125 = vld [vmem:[#allocation2 + $0x28] sm:$0xff]
    %v126 = vld [vmem:[#allocation2 + $0x30] sm:$0xff]
    %v127 = vld [vmem:[#allocation2 + $0x38] sm:$0xff]
    %v128 = vld [vmem:[#allocation2 + $0x40] sm:$0xff]
    %v129 = vld [vmem:[#allocation2 + $0x48] sm:$0xff]
    %v130 = vld [vmem:[#allocation2 + $0x50] sm:$0xff]
    %v131 = vld [vmem:[#allocation2 + $0x58] sm:$0xff]
    %v132 = vld [vmem:[#allocation2 + $0x60] sm:$0xff]
    %v133 = vld [vmem:[#allocation2 + $0x68] sm:$0xff]
    %v134 = vld [vmem:[#allocation2 + $0x70] sm:$0xff]
    %v135 = vld [vmem:[#allocation2 + $0x78] sm:$0xff]
    %v136 = vld [vmem:[#allocation2 + $0x80] sm:$0xff]
    %v137 = vld [vmem:[#allocation2 + $0x88] sm:$0xff]
    %v138 = vld [vmem:[#allocation2 + $0x90] sm:$0xff]
    %v139 = vld [vmem:[#allocation2 + $0x98] sm:$0xff]
    %v140 = vld [vmem:[#allocation2 + $0xa0] sm:$0xff]
    %v141 = vld [vmem:[#allocation2 + $0xa8] sm:$0xff]
    %v142 = vld [vmem:[#allocation2 + $0xb0] sm:$0xff]
    %v143 = vld [vmem:[#allocation2 + $0xb8] sm:$0xff]
    %v144 = vld [vmem:[#allocation2 + $0xc0] sm:$0xff]
    %v145 = vld [vmem:[#allocation2 + $0xc8] sm:$0xff]
    %v146 = vld [vmem:[#allocation2 + $0xd0] sm:$0xff]
    %v147 = vld [vmem:[#allocation2 + $0xd8] sm:$0xff]
    %v148 = vld [vmem:[#allocation2 + $0xe0] sm:$0xff]
    %v149 = vld [vmem:[#allocation2 + $0xe8] sm:$0xff]
    %v150 = vld [vmem:[#allocation2 + $0xf0] sm:$0xff]
    %v151 = vld [vmem:[#allocation2 + $0xf8] sm:$0xff]
    %v152 = vld [vmem:[#allocation2 + $0x100] sm:$0xff]
    %v153 = vld [vmem:[#allocation2 + $0x108] sm:$0xff]
    %v154 = vld [vmem:[#allocation2 + $0x110] sm:$0xff]
    %v155 = vld [vmem:[#allocation2 + $0x118] sm:$0xff]
    %v156 = vld [vmem:[#allocation2 + $0x120] sm:$0xff]
    %v157 = vld [vmem:[#allocation2 + $0x128] sm:$0xff]
    %v158 = vld [vmem:[#allocation2 + $0x130] sm:$0xff]
    %v159 = vld [vmem:[#allocation2 + $0x138] sm:$0xff]
    %v160 = vld [vmem:[#allocation2 + $0x140] sm:$0xff]
    %v161 = vld [vmem:[#allocation2 + $0x148] sm:$0xff]
    %v162 = vld [vmem:[#allocation2 + $0x150] sm:$0xff]
    %v163 = vld [vmem:[#allocation2 + $0x158] sm:$0xff]
    %v164 = vld [vmem:[#allocation2 + $0x160] sm:$0xff]
    %v165 = vld [vmem:[#allocation2 + $0x168] sm:$0xff]
    %v166 = vld [vmem:[#allocation2 + $0x170] sm:$0xff]
    %v167 = vld [vmem:[#allocation2 + $0x178] sm:$0xff]
    %v168 = vld [vmem:[#allocation2 + $0x180] sm:$0xff]
    %v169 = vld [vmem:[#allocation2 + $0x188] sm:$0xff]
    %v170 = vld [vmem:[#allocation2 + $0x190] sm:$0xff]
    %v171 = vld [vmem:[#allocation2 + $0x198] sm:$0xff]
    %v172 = vld [vmem:[#allocation2 + $0x1a0] sm:$0xff]
    %v173 = vld [vmem:[#allocation2 + $0x1a8] sm:$0xff]
    %v174 = vld [vmem:[#allocation2 + $0x1b0] sm:$0xff]
    %v175 = vld [vmem:[#allocation2 + $0x1b8] sm:$0xff]
    %v176 = vld [vmem:[#allocation2 + $0x1c0] sm:$0xff]
    %v177 = vld [vmem:[#allocation2 + $0x1c8] sm:$0xff]
    %v178 = vld [vmem:[#allocation2 + $0x1d0] sm:$0xff]
    %v179 = vld [vmem:[#allocation2 + $0x1d8] sm:$0xff]
    %v180 = vld [vmem:[#allocation2 + $0x1e0] sm:$0xff]
    %v181 = vld [vmem:[#allocation2 + $0x1e8] sm:$0xff]
    %v182 = vld [vmem:[#allocation2 + $0x1f0] sm:$0xff]
    %v183 = vld [vmem:[#allocation2 + $0x1f8] sm:$0xff]
    %v184 = vld [vmem:[#allocation2 + $0x200] sm:$0xff]
    %v185 = vld [vmem:[#allocation2 + $0x208] sm:$0xff]
    %v186 = vld [vmem:[#allocation2 + $0x210] sm:$0xff]
    %v187 = vld [vmem:[#allocation2 + $0x218] sm:$0xff]
    %v188 = vld [vmem:[#allocation2 + $0x220] sm:$0xff]
    %v189 = vld [vmem:[#allocation2 + $0x228] sm:$0xff]
    %v190 = vld [vmem:[#allocation2 + $0x230] sm:$0xff]
    %v191 = vld [vmem:[#allocation2 + $0x238] sm:$0xff]
    %v192 = vld [vmem:[#allocation2 + $0x240] sm:$0xff]
    %v193 = vld [vmem:[#allocation2 + $0x248] sm:$0xff]
    %v194 = vld [vmem:[#allocation2 + $0x250] sm:$0xff]
    %v195 = vld [vmem:[#allocation2 + $0x258] sm:$0xff]
    %v196 = vld [vmem:[#allocation2 + $0x260] sm:$0xff]
    %v197 = vld [vmem:[#allocation2 + $0x268] sm:$0xff]
    %v198 = vld [vmem:[#allocation2 + $0x270] sm:$0xff]
    %v199 = vld [vmem:[#allocation2 + $0x278] sm:$0xff]
    %v200 = vld [vmem:[#allocation2 + $0x280] sm:$0xff]
    %v201 = vld [vmem:[#allocation2 + $0x288] sm:$0xff]
    %v202 = vld [vmem:[#allocation2 + $0x290] sm:$0xff]
    %v203 = vld [vmem:[#allocation2 + $0x298] sm:$0xff]
    %v204 = vld [vmem:[#allocation2 + $0x2a0] sm:$0xff]
    %v205 = vld [vmem:[#allocation2 + $0x2a8] sm:$0xff]
    %v206 = vld [vmem:[#allocation2 + $0x2b0] sm:$0xff]
    %v207 = vld [vmem:[#allocation2 + $0x2b8] sm:$0xff]
    %v208 = vld [vmem:[#allocation2 + $0x2c0] sm:$0xff]
    %v209 = vld [vmem:[#allocation2 + $0x2c8] sm:$0xff]
    %v210 = vld [vmem:[#allocation2 + $0x2d0] sm:$0xff]
    %v211 = vld [vmem:[#allocation2 + $0x2d8] sm:$0xff]
    %v212 = vld [vmem:[#allocation2 + $0x2e0] sm:$0xff]
    %v213 = vld [vmem:[#allocation2 + $0x2e8] sm:$0xff]
    %v214 = vld [vmem:[#allocation2 + $0x2f0] sm:$0xff]
    %v215 = vld [vmem:[#allocation2 + $0x2f8] sm:$0xff]
    %v216 = vld [vmem:[#allocation2 + $0x300] sm:$0xff]
    %v217 = vld [vmem:[#allocation2 + $0x308] sm:$0xff]
    %v218 = vld [vmem:[#allocation2 + $0x310] sm:$0xff]
    %v219 = vld [vmem:[#allocation2 + $0x318] sm:$0xff]
    %v220 = vld [vmem:[#allocation2 + $0x320] sm:$0xff]
    %v221 = vld [vmem:[#allocation2 + $0x328] sm:$0xff]
    %v222 = vld [vmem:[#allocation2 + $0x330] sm:$0xff]
    %v223 = vld [vmem:[#allocation2 + $0x338] sm:$0xff]
    %v224 = vld [vmem:[#allocation2 + $0x340] sm:$0xff]
    %v225 = vld [vmem:[#allocation2 + $0x348] sm:$0xff]
    %v226 = vld [vmem:[#allocation2 + $0x350] sm:$0xff]
    %v227 = vld [vmem:[#allocation2 + $0x358] sm:$0xff]
    %v228 = vld [vmem:[#allocation2 + $0x360] sm:$0xff]
    %v229 = vld [vmem:[#allocation2 + $0x368] sm:$0xff]
    %v230 = vld [vmem:[#allocation2 + $0x370] sm:$0xff]
    %v231 = vld [vmem:[#allocation2 + $0x378] sm:$0xff]
    %v232 = vld [vmem:[#allocation2 + $0x380] sm:$0xff]
    %v233 = vld [vmem:[#allocation2 + $0x388] sm:$0xff]
    %v234 = vld [vmem:[#allocation2 + $0x390] sm:$0xff]
    %v235 = vld [vmem:[#allocation2 + $0x398] sm:$0xff]
    %v236 = vld [vmem:[#allocation2 + $0x3a0] sm:$0xff]
    %v237 = vld [vmem:[#allocation2 + $0x3a8] sm:$0xff]
    %v238 = vld [vmem:[#allocation2 + $0x3b0] sm:$0xff]
    %v239 = vld [vmem:[#allocation2 + $0x3b8] sm:$0xff]
    %v240 = vld [vmem:[#allocation2 + $0x3c0] sm:$0xff]
    %v241 = vld [vmem:[#allocation2 + $0x3c8] sm:$0xff]
    %v242 = vld [vmem:[#allocation2 + $0x3d0] sm:$0xff]
    %v243 = vld [vmem:[#allocation2 + $0x3d8] sm:$0xff]
    %v244 = vld [vmem:[#allocation2 + $0x3e0] sm:$0xff]
    %v245 = vld [vmem:[#allocation2 + $0x3e8] sm:$0xff]
    %v246 = vld [vmem:[#allocation2 + $0x3f0] sm:$0xff]
    %v247 = vld [vmem:[#allocation2 + $0x3f8] sm:$0xff]
    %v248 = vld [vmem:[#allocation2 + $0x400] sm:$0xff]
    %v249 = vld [vmem:[#allocation2 + $0x408] sm:$0xff]
    %v250 = vld [vmem:[#allocation2 + $0x410] sm:$0xff]
    %v251 = vld [vmem:[#allocation2 + $0x418] sm:$0xff]
    %v252 = vld [vmem:[#allocation2 + $0x420] sm:$0xff]
    %v253 = vld [vmem:[#allocation2 + $0x428] sm:$0xff]
    %v254 = vld [vmem:[#allocation2 + $0x430] sm:$0xff]
    %v255 = vld [vmem:[#allocation2 + $0x438] sm:$0xff]
    %v256 = vld [vmem:[#allocation2 + $0x440] sm:$0xff]
    %v257 = vld [vmem:[#allocation2 + $0x448] sm:$0xff]
    %v258 = vld [vmem:[#allocation2 + $0x450] sm:$0xff]
    %v259 = vld [vmem:[#allocation2 + $0x458] sm:$0xff]
    %v260 = vld [vmem:[#allocation2 + $0x460] sm:$0xff]
    %v261 = vld [vmem:[#allocation2 + $0x468] sm:$0xff]
    %v262 = vld [vmem:[#allocation2 + $0x470] sm:$0xff]
    %v263 = vld [vmem:[#allocation2 + $0x478] sm:$0xff]
    %v264 = vld [vmem:[#allocation2 + $0x480] sm:$0xff]
    %v265 = vld [vmem:[#allocation2 + $0x488] sm:$0xff]
    %v266 = vld [vmem:[#allocation2 + $0x490] sm:$0xff]
    %v267 = vld [vmem:[#allocation2 + $0x498] sm:$0xff]
    %v268 = vld [vmem:[#allocation2 + $0x4a0] sm:$0xff]
    %v269 = vld [vmem:[#allocation2 + $0x4a8] sm:$0xff]
    %v270 = vld [vmem:[#allocation2 + $0x4b0] sm:$0xff]
    %v271 = vld [vmem:[#allocation2 + $0x4b8] sm:$0xff]
    %v272 = vld [vmem:[#allocation2 + $0x4c0] sm:$0xff]
    %v273 = vld [vmem:[#allocation2 + $0x4c8] sm:$0xff]
    %v274 = vld [vmem:[#allocation2 + $0x4d0] sm:$0xff]
    %v275 = vld [vmem:[#allocation2 + $0x4d8] sm:$0xff]
    %v276 = vld [vmem:[#allocation2 + $0x4e0] sm:$0xff]
    %v277 = vld [vmem:[#allocation2 + $0x4e8] sm:$0xff]
    %v278 = vld [vmem:[#allocation2 + $0x4f0] sm:$0xff]
    %v279 = vld [vmem:[#allocation2 + $0x4f8] sm:$0xff]
    %v280 = vld [vmem:[#allocation2 + $0x500] sm:$0xff]
    %v281 = vld [vmem:[#allocation2 + $0x508] sm:$0xff]
    %v282 = vld [vmem:[#allocation2 + $0x510] sm:$0xff]
    %v283 = vld [vmem:[#allocation2 + $0x518] sm:$0xff]
    %v284 = vld [vmem:[#allocation2 + $0x520] sm:$0xff]
    %v285 = vld [vmem:[#allocation2 + $0x528] sm:$0xff]
    %v286 = vld [vmem:[#allocation2 + $0x530] sm:$0xff]
    %v287 = vld [vmem:[#allocation2 + $0x538] sm:$0xff]
    %v288 = vld [vmem:[#allocation2 + $0x540] sm:$0xff]
    %v289 = vld [vmem:[#allocation2 + $0x548] sm:$0xff]
    %v290 = vld [vmem:[#allocation2 + $0x550] sm:$0xff]
    %v291 = vld [vmem:[#allocation2 + $0x558] sm:$0xff]
    %v292 = vld [vmem:[#allocation2 + $0x560] sm:$0xff]
    %v293 = vld [vmem:[#allocation2 + $0x568] sm:$0xff]
    %v294 = vld [vmem:[#allocation2 + $0x570] sm:$0xff]
    %v295 = vld [vmem:[#allocation2 + $0x578] sm:$0xff]
    %v296 = vld [vmem:[#allocation2 + $0x580] sm:$0xff]
    %v297 = vld [vmem:[#allocation2 + $0x588] sm:$0xff]
    %v298 = vld [vmem:[#allocation2 + $0x590] sm:$0xff]
    %v299 = vld [vmem:[#allocation2 + $0x598] sm:$0xff]
    %v300 = vld [vmem:[#allocation2 + $0x5a0] sm:$0xff]
    %v301 = vld [vmem:[#allocation2 + $0x5a8] sm:$0xff]
    %v302 = vld [vmem:[#allocation2 + $0x5b0] sm:$0xff]
    %v303 = vld [vmem:[#allocation2 + $0x5b8] sm:$0xff]
    %v304 = vld [vmem:[#allocation2 + $0x5c0] sm:$0xff]
    %v305 = vld [vmem:[#allocation2 + $0x5c8] sm:$0xff]
    %v306 = vld [vmem:[#allocation2 + $0x5d0] sm:$0xff]
    %v307 = vld [vmem:[#allocation2 + $0x5d8] sm:$0xff]
    %v308 = vld [vmem:[#allocation2 + $0x5e0] sm:$0xff]
    %v309 = vld [vmem:[#allocation2 + $0x5e8] sm:$0xff]
    %v310 = vld [vmem:[#allocation2 + $0x5f0] sm:$0xff]
    %v311 = vld [vmem:[#allocation2 + $0x5f8] sm:$0xff]
    %v312 = vld [vmem:[#allocation2 + $0x600] sm:$0xff]
    %v313 = vld [vmem:[#allocation2 + $0x608] sm:$0xff]
    %v314 = vld [vmem:[#allocation2 + $0x610] sm:$0xff]
    %v315 = vld [vmem:[#allocation2 + $0x618] sm:$0xff]
    %v316 = vld [vmem:[#allocation2 + $0x620] sm:$0xff]
    %v317 = vld [vmem:[#allocation2 + $0x628] sm:$0xff]
    %v318 = vld [vmem:[#allocation2 + $0x630] sm:$0xff]
    %v319 = vld [vmem:[#allocation2 + $0x638] sm:$0xff]
    %v320 = vld [vmem:[#allocation2 + $0x640] sm:$0xff]
    %v321 = vld [vmem:[#allocation2 + $0x648] sm:$0xff]
    %v322 = vld [vmem:[#allocation2 + $0x650] sm:$0xff]
    %v323 = vld [vmem:[#allocation2 + $0x658] sm:$0xff]
    %v324 = vld [vmem:[#allocation2 + $0x660] sm:$0xff]
    %v325 = vld [vmem:[#allocation2 + $0x668] sm:$0xff]
    %v326 = vld [vmem:[#allocation2 + $0x670] sm:$0xff]
    %v327 = vld [vmem:[#allocation2 + $0x678] sm:$0xff]
    %v328 = vld [vmem:[#allocation2 + $0x680] sm:$0xff]
    %v329 = vld [vmem:[#allocation2 + $0x688] sm:$0xff]
    %v330 = vld [vmem:[#allocation2 + $0x690] sm:$0xff]
    %v331 = vld [vmem:[#allocation2 + $0x698] sm:$0xff]
    %v332 = vld [vmem:[#allocation2 + $0x6a0] sm:$0xff]
    %v333 = vld [vmem:[#allocation2 + $0x6a8] sm:$0xff]
    %v334 = vld [vmem:[#allocation2 + $0x6b0] sm:$0xff]
    %v335 = vld [vmem:[#allocation2 + $0x6b8] sm:$0xff]
    %v336 = vld [vmem:[#allocation2 + $0x6c0] sm:$0xff]
    %v337 = vld [vmem:[#allocation2 + $0x6c8] sm:$0xff]
    %v338 = vld [vmem:[#allocation2 + $0x6d0] sm:$0xff]
    %v339 = vld [vmem:[#allocation2 + $0x6d8] sm:$0xff]
    %v340 = vld [vmem:[#allocation2 + $0x6e0] sm:$0xff]
    %v341 = vld [vmem:[#allocation2 + $0x6e8] sm:$0xff]
    %v342 = vld [vmem:[#allocation2 + $0x6f0] sm:$0xff]
    %v343 = vld [vmem:[#allocation2 + $0x6f8] sm:$0xff]
    %v344 = vld [vmem:[#allocation2 + $0x700] sm:$0xff]
    %v345 = vld [vmem:[#allocation2 + $0x708] sm:$0xff]
    %v346 = vld [vmem:[#allocation2 + $0x710] sm:$0xff]
    %v347 = vld [vmem:[#allocation2 + $0x718] sm:$0xff]
    %v348 = vld [vmem:[#allocation2 + $0x720] sm:$0xff]
    %v349 = vld [vmem:[#allocation2 + $0x728] sm:$0xff]
    %v350 = vld [vmem:[#allocation2 + $0x730] sm:$0xff]
    %v351 = vld [vmem:[#allocation2 + $0x738] sm:$0xff]
    %v352 = vld [vmem:[#allocation2 + $0x740] sm:$0xff]
    %v353 = vld [vmem:[#allocation2 + $0x748] sm:$0xff]
    %v354 = vld [vmem:[#allocation2 + $0x750] sm:$0xff]
    %v355 = vld [vmem:[#allocation2 + $0x758] sm:$0xff]
    %v356 = vld [vmem:[#allocation2 + $0x760] sm:$0xff]
    %v357 = vld [vmem:[#allocation2 + $0x768] sm:$0xff]
    %v358 = vld [vmem:[#allocation2 + $0x770] sm:$0xff]
    %v359 = vld [vmem:[#allocation2 + $0x778] sm:$0xff]
    %v360 = vld [vmem:[#allocation2 + $0x780] sm:$0xff]
    %v361 = vld [vmem:[#allocation2 + $0x788] sm:$0xff]
    %v362 = vld [vmem:[#allocation2 + $0x790] sm:$0xff]
    %v363 = vld [vmem:[#allocation2 + $0x798] sm:$0xff]
    %v364 = vld [vmem:[#allocation2 + $0x7a0] sm:$0xff]
    %v365 = vld [vmem:[#allocation2 + $0x7a8] sm:$0xff]
    %v366 = vld [vmem:[#allocation2 + $0x7b0] sm:$0xff]
    %v367 = vld [vmem:[#allocation2 + $0x7b8] sm:$0xff]
    %v368 = vld [vmem:[#allocation2 + $0x7c0] sm:$0xff]
    %v369 = vld [vmem:[#allocation2 + $0x7c8] sm:$0xff]
    %v370 = vld [vmem:[#allocation2 + $0x7d0] sm:$0xff]
    %v371 = vld [vmem:[#allocation2 + $0x7d8] sm:$0xff]
    %v372 = vld [vmem:[#allocation2 + $0x7e0] sm:$0xff]
    %v373 = vld [vmem:[#allocation2 + $0x7e8] sm:$0xff]
    %v374 = vld [vmem:[#allocation2 + $0x7f0] sm:$0xff]
    %v375 = vld [vmem:[#allocation2 + $0x7f8] sm:$0xff]
    %v376 = vld [vmem:[#allocation2 + $0x800] sm:$0xff]
    %v377 = vld [vmem:[#allocation2 + $0x808] sm:$0xff]
    %v378 = vld [vmem:[#allocation2 + $0x810] sm:$0xff]
    %v379 = vld [vmem:[#allocation2 + $0x818] sm:$0xff]
    %v380 = vld [vmem:[#allocation2 + $0x820] sm:$0xff]
    %v381 = vld [vmem:[#allocation2 + $0x828] sm:$0xff]
    %v382 = vld [vmem:[#allocation2 + $0x830] sm:$0xff]
    %v383 = vld [vmem:[#allocation2 + $0x838] sm:$0xff]
    %v384 = vld [vmem:[#allocation2 + $0x840] sm:$0xff]
    %v385 = vld [vmem:[#allocation2 + $0x848] sm:$0xff]
    %v386 = vld [vmem:[#allocation2 + $0x850] sm:$0xff]
    %v387 = vld [vmem:[#allocation2 + $0x858] sm:$0xff]
    %v388 = vld [vmem:[#allocation2 + $0x860] sm:$0xff]
    %v389 = vld [vmem:[#allocation2 + $0x868] sm:$0xff]
    %v390 = vld [vmem:[#allocation2 + $0x870] sm:$0xff]
    %v391 = vld [vmem:[#allocation2 + $0x878] sm:$0xff]
    %v392 = vld [vmem:[#allocation2 + $0x880] sm:$0xff]
    %v393 = vld [vmem:[#allocation2 + $0x888] sm:$0xff]
    %v394 = vld [vmem:[#allocation2 + $0x890] sm:$0xff]
    %v395 = vld [vmem:[#allocation2 + $0x898] sm:$0xff]
    %v396 = vld [vmem:[#allocation2 + $0x8a0] sm:$0xff]
    %v397 = vld [vmem:[#allocation2 + $0x8a8] sm:$0xff]
    %v398 = vld [vmem:[#allocation2 + $0x8b0] sm:$0xff]
    %v399 = vld [vmem:[#allocation2 + $0x8b8] sm:$0xff]
    %v400 = vld [vmem:[#allocation2 + $0x8c0] sm:$0xff]
    %v401 = vld [vmem:[#allocation2 + $0x8c8] sm:$0xff]
    %v402 = vld [vmem:[#allocation2 + $0x8d0] sm:$0xff]
    %v403 = vld [vmem:[#allocation2 + $0x8d8] sm:$0xff]
    %v404 = vld [vmem:[#allocation2 + $0x8e0] sm:$0xff]
    %v405 = vld [vmem:[#allocation2 + $0x8e8] sm:$0xff]
    %v406 = vld [vmem:[#allocation2 + $0x8f0] sm:$0xff]
    %v407 = vld [vmem:[#allocation2 + $0x8f8] sm:$0xff]
    %v408 = vld [vmem:[#allocation2 + $0x900] sm:$0xff]
    %v409 = vld [vmem:[#allocation2 + $0x908] sm:$0xff]
    %v410 = vld [vmem:[#allocation2 + $0x910] sm:$0xff]
    %v411 = vld [vmem:[#allocation2 + $0x918] sm:$0xff]
    %v412 = vld [vmem:[#allocation2 + $0x920] sm:$0xff]
    %v413 = vld [vmem:[#allocation2 + $0x928] sm:$0xff]
    %v414 = vld [vmem:[#allocation2 + $0x930] sm:$0xff]
    %v415 = vld [vmem:[#allocation2 + $0x938] sm:$0xff]
    %v416 = vld [vmem:[#allocation2 + $0x940] sm:$0xff]
    %v417 = vld [vmem:[#allocation2 + $0x948] sm:$0xff]
    %v418 = vld [vmem:[#allocation2 + $0x950] sm:$0xff]
    %v419 = vld [vmem:[#allocation2 + $0x958] sm:$0xff]
    %v420 = vld [vmem:[#allocation2 + $0x960] sm:$0xff]
    %v421 = vld [vmem:[#allocation2 + $0x968] sm:$0xff]
    %v422 = vld [vmem:[#allocation2 + $0x970] sm:$0xff]
    %v423 = vld [vmem:[#allocation2 + $0x978] sm:$0xff]
    %v424 = vld [vmem:[#allocation2 + $0x980] sm:$0xff]
    %v425 = vld [vmem:[#allocation2 + $0x988] sm:$0xff]
    %v426 = vld [vmem:[#allocation2 + $0x990] sm:$0xff]
    %v427 = vld [vmem:[#allocation2 + $0x998] sm:$0xff]
    %v428 = vld [vmem:[#allocation2 + $0x9a0] sm:$0xff]
    %v429 = vld [vmem:[#allocation2 + $0x9a8] sm:$0xff]
    %v430 = vld [vmem:[#allocation2 + $0x9b0] sm:$0xff]
    %v431 = vld [vmem:[#allocation2 + $0x9b8] sm:$0xff]
    %v432 = vld [vmem:[#allocation2 + $0x9c0] sm:$0xff]
    %v433 = vld [vmem:[#allocation2 + $0x9c8] sm:$0xff]
    %v434 = vld [vmem:[#allocation2 + $0x9d0] sm:$0xff]
    %v435 = vld [vmem:[#allocation2 + $0x9d8] sm:$0xff]
    %v436 = vld [vmem:[#allocation2 + $0x9e0] sm:$0xff]
    %v437 = vld [vmem:[#allocation2 + $0x9e8] sm:$0xff]
    %v438 = vld [vmem:[#allocation2 + $0x9f0] sm:$0xff]
    %v439 = vld [vmem:[#allocation2 + $0x9f8] sm:$0xff]
    %v440 = vld [vmem:[#allocation2 + $0xa00] sm:$0xff]
    %v441 = vld [vmem:[#allocation2 + $0xa08] sm:$0xff]
    %v442 = vld [vmem:[#allocation2 + $0xa10] sm:$0xff]
    %v443 = vld [vmem:[#allocation2 + $0xa18] sm:$0xff]
    %v444 = vld [vmem:[#allocation2 + $0xa20] sm:$0xff]
    %v445 = vld [vmem:[#allocation2 + $0xa28] sm:$0xff]
    %v446 = vld [vmem:[#allocation2 + $0xa30] sm:$0xff]
    %v447 = vld [vmem:[#allocation2 + $0xa38] sm:$0xff]
    %v448 = vld [vmem:[#allocation2 + $0xa40] sm:$0xff]
    %v449 = vld [vmem:[#allocation2 + $0xa48] sm:$0xff]
    %v450 = vld [vmem:[#allocation2 + $0xa50] sm:$0xff]
    %v451 = vld [vmem:[#allocation2 + $0xa58] sm:$0xff]
    %v452 = vld [vmem:[#allocation2 + $0xa60] sm:$0xff]
    %v453 = vld [vmem:[#allocation2 + $0xa68] sm:$0xff]
    %v454 = vld [vmem:[#allocation2 + $0xa70] sm:$0xff]
    %v455 = vld [vmem:[#allocation2 + $0xa78] sm:$0xff]
    %v456 = vld [vmem:[#allocation2 + $0xa80] sm:$0xff]
    %v457 = vld [vmem:[#allocation2 + $0xa88] sm:$0xff]
    %v458 = vld [vmem:[#allocation2 + $0xa90] sm:$0xff]
    %v459 = vld [vmem:[#allocation2 + $0xa98] sm:$0xff]
    %v460 = vld [vmem:[#allocation2 + $0xaa0] sm:$0xff]
    %v461 = vld [vmem:[#allocation2 + $0xaa8] sm:$0xff]
    %v462 = vld [vmem:[#allocation2 + $0xab0] sm:$0xff]
    %v463 = vld [vmem:[#allocation2 + $0xab8] sm:$0xff]
    %v464 = vld [vmem:[#allocation2 + $0xac0] sm:$0xff]
    %v465 = vld [vmem:[#allocation2 + $0xac8] sm:$0xff]
    %v466 = vld [vmem:[#allocation2 + $0xad0] sm:$0xff]
    %v467 = vld [vmem:[#allocation2 + $0xad8] sm:$0xff]
    %v468 = vld [vmem:[#allocation2 + $0xae0] sm:$0xff]
    %v469 = vld [vmem:[#allocation2 + $0xae8] sm:$0xff]
    %v470 = vld [vmem:[#allocation2 + $0xaf0] sm:$0xff]
    %v471 = vld [vmem:[#allocation2 + $0xaf8] sm:$0xff]
    %v472 = vld [vmem:[#allocation2 + $0xb00] sm:$0xff]
    %v473 = vld [vmem:[#allocation2 + $0xb08] sm:$0xff]
    %v474 = vld [vmem:[#allocation2 + $0xb10] sm:$0xff]
    %v475 = vld [vmem:[#allocation2 + $0xb18] sm:$0xff]
    %v476 = vld [vmem:[#allocation2 + $0xb20] sm:$0xff]
    %v477 = vld [vmem:[#allocation2 + $0xb28] sm:$0xff]
    %v478 = vld [vmem:[#allocation2 + $0xb30] sm:$0xff]
    %v479 = vld [vmem:[#allocation2 + $0xb38] sm:$0xff]
    %v480 = vld [vmem:[#allocation2 + $0xb40] sm:$0xff]
    %v481 = vld [vmem:[#allocation2 + $0xb48] sm:$0xff]
    %v482 = vld [vmem:[#allocation2 + $0xb50] sm:$0xff]
    %v483 = vld [vmem:[#allocation2 + $0xb58] sm:$0xff]
    %v484 = vld [vmem:[#allocation2 + $0xb60] sm:$0xff]
    %v485 = vld [vmem:[#allocation2 + $0xb68] sm:$0xff]
    %v486 = vld [vmem:[#allocation2 + $0xb70] sm:$0xff]
    %v487 = vld [vmem:[#allocation2 + $0xb78] sm:$0xff]
    %v488 = vld [vmem:[#allocation2 + $0xb80] sm:$0xff]
    %v489 = vld [vmem:[#allocation2 + $0xb88] sm:$0xff]
    %v490 = vld [vmem:[#allocation2 + $0xb90] sm:$0xff]
    %v491 = vld [vmem:[#allocation2 + $0xb98] sm:$0xff]
    %v492 = vld [vmem:[#allocation2 + $0xba0] sm:$0xff]
    %v493 = vld [vmem:[#allocation2 + $0xba8] sm:$0xff]
    %v494 = vld [vmem:[#allocation2 + $0xbb0] sm:$0xff]
    %v495 = vld [vmem:[#allocation2 + $0xbb8] sm:$0xff]
    %v496 = vld [vmem:[#allocation2 + $0xbc0] sm:$0xff]
    %v497 = vld [vmem:[#allocation2 + $0xbc8] sm:$0xff]
    %v498 = vld [vmem:[#allocation2 + $0xbd0] sm:$0xff]
    %v499 = vld [vmem:[#allocation2 + $0xbd8] sm:$0xff]
    %v500 = vld [vmem:[#allocation2 + $0xbe0] sm:$0xff]
    %v501 = vld [vmem:[#allocation2 + $0xbe8] sm:$0xff]
    %v502 = vld [vmem:[#allocation2 + $0xbf0] sm:$0xff]
    %v503 = vld [vmem:[#allocation2 + $0xbf8] sm:$0xff]
    %v504 = vld [vmem:[#allocation2 + $0xc00] sm:$0xff]
    %v505 = vld [vmem:[#allocation2 + $0xc08] sm:$0xff]
    %v506 = vld [vmem:[#allocation2 + $0xc10] sm:$0xff]
    %v507 = vld [vmem:[#allocation2 + $0xc18] sm:$0xff]
    %v508 = vld [vmem:[#allocation2 + $0xc20] sm:$0xff]
    %v509 = vld [vmem:[#allocation2 + $0xc28] sm:$0xff]
    %v510 = vld [vmem:[#allocation2 + $0xc30] sm:$0xff]
    %v511 = vld [vmem:[#allocation2 + $0xc38] sm:$0xff]
    %v512 = vld [vmem:[#allocation2 + $0xc40] sm:$0xff]
    %v513 = vld [vmem:[#allocation2 + $0xc48] sm:$0xff]
    %v514 = vld [vmem:[#allocation2 + $0xc50] sm:$0xff]
    %v515 = vld [vmem:[#allocation2 + $0xc58] sm:$0xff]
    %v516 = vld [vmem:[#allocation2 + $0xc60] sm:$0xff]
    %v517 = vld [vmem:[#allocation2 + $0xc68] sm:$0xff]
    %v518 = vld [vmem:[#allocation2 + $0xc70] sm:$0xff]
    %v519 = vld [vmem:[#allocation2 + $0xc78] sm:$0xff]
    %v520 = vld [vmem:[#allocation2 + $0xc80] sm:$0xff]
    %v521 = vld [vmem:[#allocation2 + $0xc88] sm:$0xff]
    %v522 = vld [vmem:[#allocation2 + $0xc90] sm:$0xff]
    %v523 = vld [vmem:[#allocation2 + $0xc98] sm:$0xff]
    %v524 = vld [vmem:[#allocation2 + $0xca0] sm:$0xff]
    %v525 = vld [vmem:[#allocation2 + $0xca8] sm:$0xff]
    %v526 = vld [vmem:[#allocation2 + $0xcb0] sm:$0xff]
    %v527 = vld [vmem:[#allocation2 + $0xcb8] sm:$0xff]
    %v528 = vld [vmem:[#allocation2 + $0xcc0] sm:$0xff]
    %v529 = vld [vmem:[#allocation2 + $0xcc8] sm:$0xff]
    %v530 = vld [vmem:[#allocation2 + $0xcd0] sm:$0xff]
    %v531 = vld [vmem:[#allocation2 + $0xcd8] sm:$0xff]
    %v532 = vld [vmem:[#allocation2 + $0xce0] sm:$0xff]
    %v533 = vld [vmem:[#allocation2 + $0xce8] sm:$0xff]
    %v534 = vld [vmem:[#allocation2 + $0xcf0] sm:$0xff]
    %v535 = vld [vmem:[#allocation2 + $0xcf8] sm:$0xff]
    %v536 = vld [vmem:[#allocation2 + $0xd00] sm:$0xff]
    %v537 = vld [vmem:[#allocation2 + $0xd08] sm:$0xff]
    %v538 = vld [vmem:[#allocation2 + $0xd10] sm:$0xff]
    %v539 = vld [vmem:[#allocation2 + $0xd18] sm:$0xff]
    %v540 = vld [vmem:[#allocation2 + $0xd20] sm:$0xff]
    %v541 = vld [vmem:[#allocation2 + $0xd28] sm:$0xff]
    %v542 = vld [vmem:[#allocation2 + $0xd30] sm:$0xff]
    %v543 = vld [vmem:[#allocation2 + $0xd38] sm:$0xff]
    %v544 = vld [vmem:[#allocation2 + $0xd40] sm:$0xff]
    %v545 = vld [vmem:[#allocation2 + $0xd48] sm:$0xff]
    %v546 = vld [vmem:[#allocation2 + $0xd50] sm:$0xff]
    %v547 = vld [vmem:[#allocation2 + $0xd58] sm:$0xff]
    %v548 = vld [vmem:[#allocation2 + $0xd60] sm:$0xff]
    %v549 = vld [vmem:[#allocation2 + $0xd68] sm:$0xff]
    %v550 = vld [vmem:[#allocation2 + $0xd70] sm:$0xff]
    %v551 = vld [vmem:[#allocation2 + $0xd78] sm:$0xff]
    %v552 = vld [vmem:[#allocation2 + $0xd80] sm:$0xff]
    %v553 = vld [vmem:[#allocation2 + $0xd88] sm:$0xff]
    %v554 = vld [vmem:[#allocation2 + $0xd90] sm:$0xff]
    %v555 = vld [vmem:[#allocation2 + $0xd98] sm:$0xff]
    %v556 = vld [vmem:[#allocation2 + $0xda0] sm:$0xff]
    %v557 = vld [vmem:[#allocation2 + $0xda8] sm:$0xff]
    %v558 = vld [vmem:[#allocation2 + $0xdb0] sm:$0xff]
    %v559 = vld [vmem:[#allocation2 + $0xdb8] sm:$0xff]
    %v560 = vld [vmem:[#allocation2 + $0xdc0] sm:$0xff]
    %v561 = vld [vmem:[#allocation2 + $0xdc8] sm:$0xff]
    %v562 = vld [vmem:[#allocation2 + $0xdd0] sm:$0xff]
    %v563 = vld [vmem:[#allocation2 + $0xdd8] sm:$0xff]
    %v564 = vld [vmem:[#allocation2 + $0xde0] sm:$0xff]
    %v565 = vld [vmem:[#allocation2 + $0xde8] sm:$0xff]
    %v566 = vld [vmem:[#allocation2 + $0xdf0] sm:$0xff]
    %v567 = vld [vmem:[#allocation2 + $0xdf8] sm:$0xff]
    %v568 = vld [vmem:[#allocation2 + $0xe00] sm:$0xff]
    %v569 = vld [vmem:[#allocation2 + $0xe08] sm:$0xff]
    %v570 = vld [vmem:[#allocation2 + $0xe10] sm:$0xff]
    %v571 = vld [vmem:[#allocation2 + $0xe18] sm:$0xff]
    %v572 = vld [vmem:[#allocation2 + $0xe20] sm:$0xff]
    %v573 = vld [vmem:[#allocation2 + $0xe28] sm:$0xff]
    %v574 = vld [vmem:[#allocation2 + $0xe30] sm:$0xff]
    %v575 = vld [vmem:[#allocation2 + $0xe38] sm:$0xff]
    %v576 = vld [vmem:[#allocation2 + $0xe40] sm:$0xff]
    %v577 = vld [vmem:[#allocation2 + $0xe48] sm:$0xff]
    %v578 = vld [vmem:[#allocation2 + $0xe50] sm:$0xff]
    %v579 = vld [vmem:[#allocation2 + $0xe58] sm:$0xff]
    %v580 = vld [vmem:[#allocation2 + $0xe60] sm:$0xff]
    %v581 = vld [vmem:[#allocation2 + $0xe68] sm:$0xff]
    %v582 = vld [vmem:[#allocation2 + $0xe70] sm:$0xff]
    %v583 = vld [vmem:[#allocation2 + $0xe78] sm:$0xff]
    %v584 = vld [vmem:[#allocation2 + $0xe80] sm:$0xff]
    %v585 = vld [vmem:[#allocation2 + $0xe88] sm:$0xff]
    %v586 = vld [vmem:[#allocation2 + $0xe90] sm:$0xff]
    %v587 = vld [vmem:[#allocation2 + $0xe98] sm:$0xff]
    %v588 = vld [vmem:[#allocation2 + $0xea0] sm:$0xff]
    %v589 = vld [vmem:[#allocation2 + $0xea8] sm:$0xff]
    %v590 = vld [vmem:[#allocation2 + $0xeb0] sm:$0xff]
    %v591 = vld [vmem:[#allocation2 + $0xeb8] sm:$0xff]
    %v592 = vld [vmem:[#allocation2 + $0xec0] sm:$0xff]
    %v593 = vld [vmem:[#allocation2 + $0xec8] sm:$0xff]
    %v594 = vld [vmem:[#allocation2 + $0xed0] sm:$0xff]
    %v595 = vld [vmem:[#allocation2 + $0xed8] sm:$0xff]
    %v596 = vld [vmem:[#allocation2 + $0xee0] sm:$0xff]
    %v597 = vld [vmem:[#allocation2 + $0xee8] sm:$0xff]
    %v598 = vld [vmem:[#allocation2 + $0xef0] sm:$0xff]
    %v599 = vld [vmem:[#allocation2 + $0xef8] sm:$0xff]
    %v600 = vld [vmem:[#allocation2 + $0xf00] sm:$0xff]
    %v601 = vld [vmem:[#allocation2 + $0xf08] sm:$0xff]
    %v602 = vld [vmem:[#allocation2 + $0xf10] sm:$0xff]
    %v603 = vld [vmem:[#allocation2 + $0xf18] sm:$0xff]
    %v604 = vld [vmem:[#allocation2 + $0xf20] sm:$0xff]
    %v605 = vld [vmem:[#allocation2 + $0xf28] sm:$0xff]
    %v606 = vld [vmem:[#allocation2 + $0xf30] sm:$0xff]
    %v607 = vld [vmem:[#allocation2 + $0xf38] sm:$0xff]
    %v608 = vld [vmem:[#allocation2 + $0xf40] sm:$0xff]
    %v609 = vld [vmem:[#allocation2 + $0xf48] sm:$0xff]
    %v610 = vld [vmem:[#allocation2 + $0xf50] sm:$0xff]
    %v611 = vld [vmem:[#allocation2 + $0xf58] sm:$0xff]
    %v612 = vld [vmem:[#allocation2 + $0xf60] sm:$0xff]
    %v613 = vld [vmem:[#allocation2 + $0xf68] sm:$0xff]
    %v614 = vld [vmem:[#allocation2 + $0xf70] sm:$0xff]
    %v615 = vld [vmem:[#allocation2 + $0xf78] sm:$0xff]
    %v616 = vld [vmem:[#allocation2 + $0xf80] sm:$0xff]
    %v617 = vld [vmem:[#allocation2 + $0xf88] sm:$0xff]
    %v618 = vld [vmem:[#allocation2 + $0xf90] sm:$0xff]
    %v619 = vld [vmem:[#allocation2 + $0xf98] sm:$0xff]
    %v620 = vld [vmem:[#allocation2 + $0xfa0] sm:$0xff]
    %v621 = vld [vmem:[#allocation2 + $0xfa8] sm:$0xff]
    %v622 = vld [vmem:[#allocation2 + $0xfb0] sm:$0xff]
    %v623 = vld [vmem:[#allocation2 + $0xfb8] sm:$0xff]
    %v624 = vld [vmem:[#allocation2 + $0xfc0] sm:$0xff]
    %v625 = vld [vmem:[#allocation2 + $0xfc8] sm:$0xff]
    %v626 = vld [vmem:[#allocation2 + $0xfd0] sm:$0xff]
    %v627 = vld [vmem:[#allocation2 + $0xfd8] sm:$0xff]
    %v628 = vld [vmem:[#allocation2 + $0xfe0] sm:$0xff]
    %v629 = vld [vmem:[#allocation2 + $0xfe8] sm:$0xff]
    %v630 = vld [vmem:[#allocation2 + $0xff0] sm:$0xff]
    %v631 = vld [vmem:[#allocation2 + $0xff8] sm:$0xff]
    %v632 = vld [vmem:[%s0] sm:$0xff]
    %v633 = vld [vmem:[%s0 + $0x8] sm:$0xff]
    %v634 = vld [vmem:[#allocation5] sm:$0xf]
    %v636 = vlaneseq
    %v637 = vshrl.u32 %v636, 7
    %v638 = vsub.s32 0, %v637
    %v639 = vrot.slane %v634, %v638
    %v640 = vlaneseq
    %v641 = vshrl.u32 %v640, 7
    %v642 = vsub.s32 1, %v641
    %v643 = vrot.slane %v634, %v642
    %v644 = vlaneseq
    %v645 = vshrl.u32 %v644, 7
    %v646 = vsub.s32 2, %v645
    %v647 = vrot.slane %v634, %v646
    %v648 = vlaneseq
    %v649 = vshrl.u32 %v648, 7
    %v650 = vsub.s32 3, %v649
    %v651 = vrot.slane %v634, %v650
    %v658 = vcombine.high %v632, %v632
    %v660 = vunpack.c.l.s4 1983009808
    %v661 = vunpack.c.0.s8 %v660
    %v662 = vlaneseq
    %v663 = vshrl.u32 %v662, 7
    %v664 = vsub.s32 %v661, %v663
    %v665 = vrot.slane %v632, %v664
    %v667 = vunpack.c.l.s4 1983009808
    %v668 = vunpack.c.0.s8 %v667
    %v669 = vlaneseq
    %v670 = vshrl.u32 %v669, 7
    %v671 = vsub.s32 %v668, %v670
    %v672 = vrot.slane %v658, %v671
    %v673 = vcombine.high %v665, %v665
    %v674 = vcombine.high %v672, %v672
    %v675 = vcombine.high %v633, %v633
    %v677 = vunpack.c.l.s4 1983009808
    %v678 = vunpack.c.0.s8 %v677
    %v679 = vlaneseq
    %v680 = vshrl.u32 %v679, 7
    %v681 = vsub.s32 %v678, %v680
    %v682 = vrot.slane %v633, %v681
    %v684 = vunpack.c.l.s4 1983009808
    %v685 = vunpack.c.0.s8 %v684
    %v686 = vlaneseq
    %v687 = vshrl.u32 %v686, 7
    %v688 = vsub.s32 %v685, %v687
    %v689 = vrot.slane %v675, %v688
    %v690 = vcombine.high %v682, %v682
    %v691 = vcombine.high %v689, %v689
    %700 = vmatprep.subr.mxu0 %v121
    %701 = vmatpush1.msra.mxu0 %v120
    %702 = vmatprep.subr.mxu0 %v125
    %703 = vmatpush1.msra.mxu0 %v124
    %704 = vmatprep.subr.mxu0 %v129
    %705 = vmatpush1.msra.mxu0 %v128
    %706 = vmatprep.subr.mxu0 %v133
    %707 = vmatpush1.msra.mxu0 %v132
    %708 = vmatprep.subr.mxu0 %v137
    %709 = vmatpush1.msra.mxu0 %v136
    %710 = vmatprep.subr.mxu0 %v141
    %711 = vmatpush1.msra.mxu0 %v140
    %712 = vmatprep.subr.mxu0 %v145
    %713 = vmatpush1.msra.mxu0 %v144
    %714 = vmatprep.subr.mxu0 %v149
    %715 = vmatpush1.msra.mxu0 %v148
    %716 = vmatprep.subr.mxu0 %v153
    %717 = vmatpush1.msra.mxu0 %v152
    %718 = vmatprep.subr.mxu0 %v157
    %719 = vmatpush1.msra.mxu0 %v156
    %720 = vmatprep.subr.mxu0 %v161
    %721 = vmatpush1.msra.mxu0 %v160
    %722 = vmatprep.subr.mxu0 %v165
    %723 = vmatpush1.msra.mxu0 %v164
    %724 = vmatprep.subr.mxu0 %v169
    %725 = vmatpush1.msra.mxu0 %v168
    %726 = vmatprep.subr.mxu0 %v173
    %727 = vmatpush1.msra.mxu0 %v172
    %728 = vmatprep.subr.mxu0 %v177
    %729 = vmatpush1.msra.mxu0 %v176
    %730 = vmatprep.subr.mxu0 %v181
    %731 = vmatpush1.msra.mxu0 %v180
    %732 = vmatprep.subr.mxu0 %v185
    %733 = vmatpush1.msra.mxu0 %v184
    %734 = vmatprep.subr.mxu0 %v189
    %735 = vmatpush1.msra.mxu0 %v188
    %736 = vmatprep.subr.mxu0 %v193
    %737 = vmatpush1.msra.mxu0 %v192
    %738 = vmatprep.subr.mxu0 %v197
    %739 = vmatpush1.msra.mxu0 %v196
    %740 = vmatprep.subr.mxu0 %v201
    %741 = vmatpush1.msra.mxu0 %v200
    %742 = vmatprep.subr.mxu0 %v205
    %743 = vmatpush1.msra.mxu0 %v204
    %744 = vmatprep.subr.mxu0 %v209
    %745 = vmatpush1.msra.mxu0 %v208
    %746 = vmatprep.subr.mxu0 %v213
    %747 = vmatpush1.msra.mxu0 %v212
    %748 = vmatprep.subr.mxu0 %v217
    %749 = vmatpush1.msra.mxu0 %v216
    %750 = vmatprep.subr.mxu0 %v221
    %751 = vmatpush1.msra.mxu0 %v220
    %752 = vmatprep.subr.mxu0 %v225
    %753 = vmatpush1.msra.mxu0 %v224
    %754 = vmatprep.subr.mxu0 %v229
    %755 = vmatpush1.msra.mxu0 %v228
    %756 = vmatprep.subr.mxu0 %v233
    %757 = vmatpush1.msra.mxu0 %v232
    %758 = vmatprep.subr.mxu0 %v237
    %759 = vmatpush1.msra.mxu0 %v236
    %760 = vmatprep.subr.mxu0 %v241
    %761 = vmatpush1.msra.mxu0 %v240
    %762 = vmatprep.subr.mxu0 %v245
    %763 = vmatpush1.msra.mxu0 %v244
    %764 = vmatprep.mubr.f32.mxu0 %v673
    %765 = vmatmul.mubr.f32.gmra.mrb[0].mxu0 %v665
    %v766 = vpop.f32.mrb[0].mxu0
    %v767 = vadd.f32 %v639, %v766
    %v768 = vpop.f32.mrb[0].mxu0
    %v769 = vadd.f32 %v643, %v768
    %770 = vdwg.mxu0
    %771 = vmatprep.subr.mxu0 %v249
    %772 = vmatpush1.msra.mxu0 %v248
    %773 = vmatprep.subr.mxu0 %v253
    %774 = vmatpush1.msra.mxu0 %v252
    %775 = vmatprep.subr.mxu0 %v257
    %776 = vmatpush1.msra.mxu0 %v256
    %777 = vmatprep.subr.mxu0 %v261
    %778 = vmatpush1.msra.mxu0 %v260
    %779 = vmatprep.subr.mxu0 %v265
    %780 = vmatpush1.msra.mxu0 %v264
    %781 = vmatprep.subr.mxu0 %v269
    %782 = vmatpush1.msra.mxu0 %v268
    %783 = vmatprep.subr.mxu0 %v273
    %784 = vmatpush1.msra.mxu0 %v272
    %785 = vmatprep.subr.mxu0 %v277
    %786 = vmatpush1.msra.mxu0 %v276
    %787 = vmatprep.subr.mxu0 %v281
    %788 = vmatpush1.msra.mxu0 %v280
    %789 = vmatprep.subr.mxu0 %v285
    %790 = vmatpush1.msra.mxu0 %v284
    %791 = vmatprep.subr.mxu0 %v289
    %792 = vmatpush1.msra.mxu0 %v288
    %793 = vmatprep.subr.mxu0 %v293
    %794 = vmatpush1.msra.mxu0 %v292
    %795 = vmatprep.subr.mxu0 %v297
    %796 = vmatpush1.msra.mxu0 %v296
    %797 = vmatprep.subr.mxu0 %v301
    %798 = vmatpush1.msra.mxu0 %v300
    %799 = vmatprep.subr.mxu0 %v305
    %800 = vmatpush1.msra.mxu0 %v304
    %801 = vmatprep.subr.mxu0 %v309
    %802 = vmatpush1.msra.mxu0 %v308
    %803 = vmatprep.subr.mxu0 %v313
    %804 = vmatpush1.msra.mxu0 %v312
    %805 = vmatprep.subr.mxu0 %v317
    %806 = vmatpush1.msra.mxu0 %v316
    %807 = vmatprep.subr.mxu0 %v321
    %808 = vmatpush1.msra.mxu0 %v320
    %809 = vmatprep.subr.mxu0 %v325
    %810 = vmatpush1.msra.mxu0 %v324
    %811 = vmatprep.subr.mxu0 %v329
    %812 = vmatpush1.msra.mxu0 %v328
    %813 = vmatprep.subr.mxu0 %v333
    %814 = vmatpush1.msra.mxu0 %v332
    %815 = vmatprep.subr.mxu0 %v337
    %816 = vmatpush1.msra.mxu0 %v336
    %817 = vmatprep.subr.mxu0 %v341
    %818 = vmatpush1.msra.mxu0 %v340
    %819 = vmatprep.subr.mxu0 %v345
    %820 = vmatpush1.msra.mxu0 %v344
    %821 = vmatprep.subr.mxu0 %v349
    %822 = vmatpush1.msra.mxu0 %v348
    %823 = vmatprep.subr.mxu0 %v353
    %824 = vmatpush1.msra.mxu0 %v352
    %825 = vmatprep.subr.mxu0 %v357
    %826 = vmatpush1.msra.mxu0 %v356
    %827 = vmatprep.subr.mxu0 %v361
    %828 = vmatpush1.msra.mxu0 %v360
    %829 = vmatprep.subr.mxu0 %v365
    %830 = vmatpush1.msra.mxu0 %v364
    %831 = vmatprep.subr.mxu0 %v369
    %832 = vmatpush1.msra.mxu0 %v368
    %833 = vmatprep.subr.mxu0 %v373
    %834 = vmatpush1.msra.mxu0 %v372
    %835 = vmatprep.mubr.f32.mxu0 %v674
    %836 = vmatmul.mubr.f32.gmra.mrb[0].mxu0 %v672
    %v837 = vpop.f32.mrb[0].mxu0
    %v838 = vadd.f32 %v767, %v837
    %v839 = vpop.f32.mrb[0].mxu0
    %v840 = vadd.f32 %v769, %v839
    %841 = vdwg.mxu0
    %842 = vmatprep.subr.mxu0 %v377
    %843 = vmatpush1.msra.mxu0 %v376
    %844 = vmatprep.subr.mxu0 %v381
    %845 = vmatpush1.msra.mxu0 %v380
    %846 = vmatprep.subr.mxu0 %v385
    %847 = vmatpush1.msra.mxu0 %v384
    %848 = vmatprep.subr.mxu0 %v389
    %849 = vmatpush1.msra.mxu0 %v388
    %850 = vmatprep.subr.mxu0 %v393
    %851 = vmatpush1.msra.mxu0 %v392
    %852 = vmatprep.subr.mxu0 %v397
    %853 = vmatpush1.msra.mxu0 %v396
    %854 = vmatprep.subr.mxu0 %v401
    %855 = vmatpush1.msra.mxu0 %v400
    %856 = vmatprep.subr.mxu0 %v405
    %857 = vmatpush1.msra.mxu0 %v404
    %858 = vmatprep.subr.mxu0 %v409
    %859 = vmatpush1.msra.mxu0 %v408
    %860 = vmatprep.subr.mxu0 %v413
    %861 = vmatpush1.msra.mxu0 %v412
    %862 = vmatprep.subr.mxu0 %v417
    %863 = vmatpush1.msra.mxu0 %v416
    %864 = vmatprep.subr.mxu0 %v421
    %865 = vmatpush1.msra.mxu0 %v420
    %866 = vmatprep.subr.mxu0 %v425
    %867 = vmatpush1.msra.mxu0 %v424
    %868 = vmatprep.subr.mxu0 %v429
    %869 = vmatpush1.msra.mxu0 %v428
    %870 = vmatprep.subr.mxu0 %v433
    %871 = vmatpush1.msra.mxu0 %v432
    %872 = vmatprep.subr.mxu0 %v437
    %873 = vmatpush1.msra.mxu0 %v436
    %874 = vmatprep.subr.mxu0 %v441
    %875 = vmatpush1.msra.mxu0 %v440
    %876 = vmatprep.subr.mxu0 %v445
    %877 = vmatpush1.msra.mxu0 %v444
    %878 = vmatprep.subr.mxu0 %v449
    %879 = vmatpush1.msra.mxu0 %v448
    %880 = vmatprep.subr.mxu0 %v453
    %881 = vmatpush1.msra.mxu0 %v452
    %882 = vmatprep.subr.mxu0 %v457
    %883 = vmatpush1.msra.mxu0 %v456
    %884 = vmatprep.subr.mxu0 %v461
    %885 = vmatpush1.msra.mxu0 %v460
    %886 = vmatprep.subr.mxu0 %v465
    %887 = vmatpush1.msra.mxu0 %v464
    %888 = vmatprep.subr.mxu0 %v469
    %889 = vmatpush1.msra.mxu0 %v468
    %890 = vmatprep.subr.mxu0 %v473
    %891 = vmatpush1.msra.mxu0 %v472
    %892 = vmatprep.subr.mxu0 %v477
    %893 = vmatpush1.msra.mxu0 %v476
    %894 = vmatprep.subr.mxu0 %v481
    %895 = vmatpush1.msra.mxu0 %v480
    %896 = vmatprep.subr.mxu0 %v485
    %897 = vmatpush1.msra.mxu0 %v484
    %898 = vmatprep.subr.mxu0 %v489
    %899 = vmatpush1.msra.mxu0 %v488
    %900 = vmatprep.subr.mxu0 %v493
    %901 = vmatpush1.msra.mxu0 %v492
    %902 = vmatprep.subr.mxu0 %v497
    %903 = vmatpush1.msra.mxu0 %v496
    %904 = vmatprep.subr.mxu0 %v501
    %905 = vmatpush1.msra.mxu0 %v500
    %906 = vmatprep.mubr.f32.mxu0 %v690
    %907 = vmatmul.mubr.f32.gmra.mrb[0].mxu0 %v682
    %v908 = vpop.f32.mrb[0].mxu0
    %v909 = vadd.f32 %v838, %v908
    %v910 = vpop.f32.mrb[0].mxu0
    %v911 = vadd.f32 %v840, %v910
    %912 = vdwg.mxu0
    %913 = vmatprep.subr.mxu0 %v505
    %914 = vmatpush1.msra.mxu0 %v504
    %915 = vmatprep.subr.mxu0 %v509
    %916 = vmatpush1.msra.mxu0 %v508
    %917 = vmatprep.subr.mxu0 %v513
    %918 = vmatpush1.msra.mxu0 %v512
    %919 = vmatprep.subr.mxu0 %v517
    %920 = vmatpush1.msra.mxu0 %v516
    %921 = vmatprep.subr.mxu0 %v521
    %922 = vmatpush1.msra.mxu0 %v520
    %923 = vmatprep.subr.mxu0 %v525
    %924 = vmatpush1.msra.mxu0 %v524
    %925 = vmatprep.subr.mxu0 %v529
    %926 = vmatpush1.msra.mxu0 %v528
    %927 = vmatprep.subr.mxu0 %v533
    %928 = vmatpush1.msra.mxu0 %v532
    %929 = vmatprep.subr.mxu0 %v537
    %930 = vmatpush1.msra.mxu0 %v536
    %931 = vmatprep.subr.mxu0 %v541
    %932 = vmatpush1.msra.mxu0 %v540
    %933 = vmatprep.subr.mxu0 %v545
    %934 = vmatpush1.msra.mxu0 %v544
    %935 = vmatprep.subr.mxu0 %v549
    %936 = vmatpush1.msra.mxu0 %v548
    %937 = vmatprep.subr.mxu0 %v553
    %938 = vmatpush1.msra.mxu0 %v552
    %939 = vmatprep.subr.mxu0 %v557
    %940 = vmatpush1.msra.mxu0 %v556
    %941 = vmatprep.subr.mxu0 %v561
    %942 = vmatpush1.msra.mxu0 %v560
    %943 = vmatprep.subr.mxu0 %v565
    %944 = vmatpush1.msra.mxu0 %v564
    %945 = vmatprep.subr.mxu0 %v569
    %946 = vmatpush1.msra.mxu0 %v568
    %947 = vmatprep.subr.mxu0 %v573
    %948 = vmatpush1.msra.mxu0 %v572
    %949 = vmatprep.subr.mxu0 %v577
    %950 = vmatpush1.msra.mxu0 %v576
    %951 = vmatprep.subr.mxu0 %v581
    %952 = vmatpush1.msra.mxu0 %v580
    %953 = vmatprep.subr.mxu0 %v585
    %954 = vmatpush1.msra.mxu0 %v584
    %955 = vmatprep.subr.mxu0 %v589
    %956 = vmatpush1.msra.mxu0 %v588
    %957 = vmatprep.subr.mxu0 %v593
    %958 = vmatpush1.msra.mxu0 %v592
    %959 = vmatprep.subr.mxu0 %v597
    %960 = vmatpush1.msra.mxu0 %v596
    %961 = vmatprep.subr.mxu0 %v601
    %962 = vmatpush1.msra.mxu0 %v600
    %963 = vmatprep.subr.mxu0 %v605
    %964 = vmatpush1.msra.mxu0 %v604
    %965 = vmatprep.subr.mxu0 %v609
    %966 = vmatpush1.msra.mxu0 %v608
    %967 = vmatprep.subr.mxu0 %v613
    %968 = vmatpush1.msra.mxu0 %v612
    %969 = vmatprep.subr.mxu0 %v617
    %970 = vmatpush1.msra.mxu0 %v616
    %971 = vmatprep.subr.mxu0 %v621
    %972 = vmatpush1.msra.mxu0 %v620
    %973 = vmatprep.subr.mxu0 %v625
    %974 = vmatpush1.msra.mxu0 %v624
    %975 = vmatprep.subr.mxu0 %v629
    %976 = vmatpush1.msra.mxu0 %v628
    %977 = vmatprep.mubr.f32.mxu0 %v691
    %978 = vmatmul.mubr.f32.gmra.mrb[0].mxu0 %v689
    %v979 = vpop.f32.mrb[0].mxu0
    %v980 = vadd.f32 %v909, %v979
    %v981 = vpop.f32.mrb[0].mxu0
    %v982 = vadd.f32 %v911, %v981
    %983 = vdwg.mxu0
    %984 = vmatprep.subr.mxu0 %v123
    %985 = vmatpush1.msra.mxu0 %v122
    %986 = vmatprep.subr.mxu0 %v127
    %987 = vmatpush1.msra.mxu0 %v126
    %988 = vmatprep.subr.mxu0 %v131
    %989 = vmatpush1.msra.mxu0 %v130
    %990 = vmatprep.subr.mxu0 %v135
    %991 = vmatpush1.msra.mxu0 %v134
    %992 = vmatprep.subr.mxu0 %v139
    %993 = vmatpush1.msra.mxu0 %v138
    %994 = vmatprep.subr.mxu0 %v143
    %995 = vmatpush1.msra.mxu0 %v142
    %996 = vmatprep.subr.mxu0 %v147
    %997 = vmatpush1.msra.mxu0 %v146
    %998 = vmatprep.subr.mxu0 %v151
    %999 = vmatpush1.msra.mxu0 %v150
    %1000 = vmatprep.subr.mxu0 %v155
    %1001 = vmatpush1.msra.mxu0 %v154
    %1002 = vmatprep.subr.mxu0 %v159
    %1003 = vmatpush1.msra.mxu0 %v158
    %1004 = vmatprep.subr.mxu0 %v163
    %1005 = vmatpush1.msra.mxu0 %v162
    %1006 = vmatprep.subr.mxu0 %v167
    %1007 = vmatpush1.msra.mxu0 %v166
    %1008 = vmatprep.subr.mxu0 %v171
    %1009 = vmatpush1.msra.mxu0 %v170
    %1010 = vmatprep.subr.mxu0 %v175
    %1011 = vmatpush1.msra.mxu0 %v174
    %1012 = vmatprep.subr.mxu0 %v179
    %1013 = vmatpush1.msra.mxu0 %v178
    %1014 = vmatprep.subr.mxu0 %v183
    %1015 = vmatpush1.msra.mxu0 %v182
    %1016 = vmatprep.subr.mxu0 %v187
    %1017 = vmatpush1.msra.mxu0 %v186
    %1018 = vmatprep.subr.mxu0 %v191
    %1019 = vmatpush1.msra.mxu0 %v190
    %1020 = vmatprep.subr.mxu0 %v195
    %1021 = vmatpush1.msra.mxu0 %v194
    %1022 = vmatprep.subr.mxu0 %v199
    %1023 = vmatpush1.msra.mxu0 %v198
    %1024 = vmatprep.subr.mxu0 %v203
    %1025 = vmatpush1.msra.mxu0 %v202
    %1026 = vmatprep.subr.mxu0 %v207
    %1027 = vmatpush1.msra.mxu0 %v206
    %1028 = vmatprep.subr.mxu0 %v211
    %1029 = vmatpush1.msra.mxu0 %v210
    %1030 = vmatprep.subr.mxu0 %v215
    %1031 = vmatpush1.msra.mxu0 %v214
    %1032 = vmatprep.subr.mxu0 %v219
    %1033 = vmatpush1.msra.mxu0 %v218
    %1034 = vmatprep.subr.mxu0 %v223
    %1035 = vmatpush1.msra.mxu0 %v222
    %1036 = vmatprep.subr.mxu0 %v227
    %1037 = vmatpush1.msra.mxu0 %v226
    %1038 = vmatprep.subr.mxu0 %v231
    %1039 = vmatpush1.msra.mxu0 %v230
    %1040 = vmatprep.subr.mxu0 %v235
    %1041 = vmatpush1.msra.mxu0 %v234
    %1042 = vmatprep.subr.mxu0 %v239
    %1043 = vmatpush1.msra.mxu0 %v238
    %1044 = vmatprep.subr.mxu0 %v243
    %1045 = vmatpush1.msra.mxu0 %v242
    %1046 = vmatprep.subr.mxu0 %v247
    %1047 = vmatpush1.msra.mxu0 %v246
    %1048 = vmatprep.mubr.f32.mxu0 %v673
    %1049 = vmatmul.mubr.f32.gmra.mrb[0].mxu0 %v665
    %v1050 = vpop.f32.mrb[0].mxu0
    %v1051 = vadd.f32 %v647, %v1050
    %v1052 = vpop.f32.mrb[0].mxu0
    %v1053 = vadd.f32 %v651, %v1052
    %1054 = vdwg.mxu0
    %1055 = vmatprep.subr.mxu0 %v251
    %1056 = vmatpush1.msra.mxu0 %v250
    %1057 = vmatprep.subr.mxu0 %v255
    %1058 = vmatpush1.msra.mxu0 %v254
    %1059 = vmatprep.subr.mxu0 %v259
    %1060 = vmatpush1.msra.mxu0 %v258
    %1061 = vmatprep.subr.mxu0 %v263
    %1062 = vmatpush1.msra.mxu0 %v262
    %1063 = vmatprep.subr.mxu0 %v267
    %1064 = vmatpush1.msra.mxu0 %v266
    %1065 = vmatprep.subr.mxu0 %v271
    %1066 = vmatpush1.msra.mxu0 %v270
    %1067 = vmatprep.subr.mxu0 %v275
    %1068 = vmatpush1.msra.mxu0 %v274
    %1069 = vmatprep.subr.mxu0 %v279
    %1070 = vmatpush1.msra.mxu0 %v278
    %1071 = vmatprep.subr.mxu0 %v283
    %1072 = vmatpush1.msra.mxu0 %v282
    %1073 = vmatprep.subr.mxu0 %v287
    %1074 = vmatpush1.msra.mxu0 %v286
    %1075 = vmatprep.subr.mxu0 %v291
    %1076 = vmatpush1.msra.mxu0 %v290
    %1077 = vmatprep.subr.mxu0 %v295
    %1078 = vmatpush1.msra.mxu0 %v294
    %1079 = vmatprep.subr.mxu0 %v299
    %1080 = vmatpush1.msra.mxu0 %v298
    %1081 = vmatprep.subr.mxu0 %v303
    %1082 = vmatpush1.msra.mxu0 %v302
    %1083 = vmatprep.subr.mxu0 %v307
    %1084 = vmatpush1.msra.mxu0 %v306
    %1085 = vmatprep.subr.mxu0 %v311
    %1086 = vmatpush1.msra.mxu0 %v310
    %1087 = vmatprep.subr.mxu0 %v315
    %1088 = vmatpush1.msra.mxu0 %v314
    %1089 = vmatprep.subr.mxu0 %v319
    %1090 = vmatpush1.msra.mxu0 %v318
    %1091 = vmatprep.subr.mxu0 %v323
    %1092 = vmatpush1.msra.mxu0 %v322
    %1093 = vmatprep.subr.mxu0 %v327
    %1094 = vmatpush1.msra.mxu0 %v326
    %1095 = vmatprep.subr.mxu0 %v331
    %1096 = vmatpush1.msra.mxu0 %v330
    %1097 = vmatprep.subr.mxu0 %v335
    %1098 = vmatpush1.msra.mxu0 %v334
    %1099 = vmatprep.subr.mxu0 %v339
    %1100 = vmatpush1.msra.mxu0 %v338
    %1101 = vmatprep.subr.mxu0 %v343
    %1102 = vmatpush1.msra.mxu0 %v342
    %1103 = vmatprep.subr.mxu0 %v347
    %1104 = vmatpush1.msra.mxu0 %v346
    %1105 = vmatprep.subr.mxu0 %v351
    %1106 = vmatpush1.msra.mxu0 %v350
    %1107 = vmatprep.subr.mxu0 %v355
    %1108 = vmatpush1.msra.mxu0 %v354
    %1109 = vmatprep.subr.mxu0 %v359
    %1110 = vmatpush1.msra.mxu0 %v358
    %1111 = vmatprep.subr.mxu0 %v363
    %1112 = vmatpush1.msra.mxu0 %v362
    %1113 = vmatprep.subr.mxu0 %v367
    %1114 = vmatpush1.msra.mxu0 %v366
    %1115 = vmatprep.subr.mxu0 %v371
    %1116 = vmatpush1.msra.mxu0 %v370
    %1117 = vmatprep.subr.mxu0 %v375
    %1118 = vmatpush1.msra.mxu0 %v374
    %1119 = vmatprep.mubr.f32.mxu0 %v674
    %1120 = vmatmul.mubr.f32.gmra.mrb[0].mxu0 %v672
    %v1121 = vpop.f32.mrb[0].mxu0
    %v1122 = vadd.f32 %v1051, %v1121
    %v1123 = vpop.f32.mrb[0].mxu0
    %v1124 = vadd.f32 %v1053, %v1123
    %1125 = vdwg.mxu0
    %1126 = vmatprep.subr.mxu0 %v379
    %1127 = vmatpush1.msra.mxu0 %v378
    %1128 = vmatprep.subr.mxu0 %v383
    %1129 = vmatpush1.msra.mxu0 %v382
    %1130 = vmatprep.subr.mxu0 %v387
    %1131 = vmatpush1.msra.mxu0 %v386
    %1132 = vmatprep.subr.mxu0 %v391
    %1133 = vmatpush1.msra.mxu0 %v390
    %1134 = vmatprep.subr.mxu0 %v395
    %1135 = vmatpush1.msra.mxu0 %v394
    %1136 = vmatprep.subr.mxu0 %v399
    %1137 = vmatpush1.msra.mxu0 %v398
    %1138 = vmatprep.subr.mxu0 %v403
    %1139 = vmatpush1.msra.mxu0 %v402
    %1140 = vmatprep.subr.mxu0 %v407
    %1141 = vmatpush1.msra.mxu0 %v406
    %1142 = vmatprep.subr.mxu0 %v411
    %1143 = vmatpush1.msra.mxu0 %v410
    %1144 = vmatprep.subr.mxu0 %v415
    %1145 = vmatpush1.msra.mxu0 %v414
    %1146 = vmatprep.subr.mxu0 %v419
    %1147 = vmatpush1.msra.mxu0 %v418
    %1148 = vmatprep.subr.mxu0 %v423
    %1149 = vmatpush1.msra.mxu0 %v422
    %1150 = vmatprep.subr.mxu0 %v427
    %1151 = vmatpush1.msra.mxu0 %v426
    %1152 = vmatprep.subr.mxu0 %v431
    %1153 = vmatpush1.msra.mxu0 %v430
    %1154 = vmatprep.subr.mxu0 %v435
    %1155 = vmatpush1.msra.mxu0 %v434
    %1156 = vmatprep.subr.mxu0 %v439
    %1157 = vmatpush1.msra.mxu0 %v438
    %1158 = vmatprep.subr.mxu0 %v443
    %1159 = vmatpush1.msra.mxu0 %v442
    %1160 = vmatprep.subr.mxu0 %v447
    %1161 = vmatpush1.msra.mxu0 %v446
    %1162 = vmatprep.subr.mxu0 %v451
    %1163 = vmatpush1.msra.mxu0 %v450
    %1164 = vmatprep.subr.mxu0 %v455
    %1165 = vmatpush1.msra.mxu0 %v454
    %1166 = vmatprep.subr.mxu0 %v459
    %1167 = vmatpush1.msra.mxu0 %v458
    %1168 = vmatprep.subr.mxu0 %v463
    %1169 = vmatpush1.msra.mxu0 %v462
    %1170 = vmatprep.subr.mxu0 %v467
    %1171 = vmatpush1.msra.mxu0 %v466
    %1172 = vmatprep.subr.mxu0 %v471
    %1173 = vmatpush1.msra.mxu0 %v470
    %1174 = vmatprep.subr.mxu0 %v475
    %1175 = vmatpush1.msra.mxu0 %v474
    %1176 = vmatprep.subr.mxu0 %v479
    %1177 = vmatpush1.msra.mxu0 %v478
    %1178 = vmatprep.subr.mxu0 %v483
    %1179 = vmatpush1.msra.mxu0 %v482
    %1180 = vmatprep.subr.mxu0 %v487
    %1181 = vmatpush1.msra.mxu0 %v486
    %1182 = vmatprep.subr.mxu0 %v491
    %1183 = vmatpush1.msra.mxu0 %v490
    %1184 = vmatprep.subr.mxu0 %v495
    %1185 = vmatpush1.msra.mxu0 %v494
    %1186 = vmatprep.subr.mxu0 %v499
    %1187 = vmatpush1.msra.mxu0 %v498
    %1188 = vmatprep.subr.mxu0 %v503
    %1189 = vmatpush1.msra.mxu0 %v502
    %1190 = vmatprep.mubr.f32.mxu0 %v690
    %1191 = vmatmul.mubr.f32.gmra.mrb[0].mxu0 %v682
    %v1192 = vpop.f32.mrb[0].mxu0
    %v1193 = vadd.f32 %v1122, %v1192
    %v1194 = vpop.f32.mrb[0].mxu0
    %v1195 = vadd.f32 %v1124, %v1194
    %1196 = vdwg.mxu0
    %1197 = vmatprep.subr.mxu0 %v507
    %1198 = vmatpush1.msra.mxu0 %v506
    %1199 = vmatprep.subr.mxu0 %v511
    %1200 = vmatpush1.msra.mxu0 %v510
    %1201 = vmatprep.subr.mxu0 %v515
    %1202 = vmatpush1.msra.mxu0 %v514
    %1203 = vmatprep.subr.mxu0 %v519
    %1204 = vmatpush1.msra.mxu0 %v518
    %1205 = vmatprep.subr.mxu0 %v523
    %1206 = vmatpush1.msra.mxu0 %v522
    %1207 = vmatprep.subr.mxu0 %v527
    %1208 = vmatpush1.msra.mxu0 %v526
    %1209 = vmatprep.subr.mxu0 %v531
    %1210 = vmatpush1.msra.mxu0 %v530
    %1211 = vmatprep.subr.mxu0 %v535
    %1212 = vmatpush1.msra.mxu0 %v534
    %1213 = vmatprep.subr.mxu0 %v539
    %1214 = vmatpush1.msra.mxu0 %v538
    %1215 = vmatprep.subr.mxu0 %v543
    %1216 = vmatpush1.msra.mxu0 %v542
    %1217 = vmatprep.subr.mxu0 %v547
    %1218 = vmatpush1.msra.mxu0 %v546
    %1219 = vmatprep.subr.mxu0 %v551
    %1220 = vmatpush1.msra.mxu0 %v550
    %1221 = vmatprep.subr.mxu0 %v555
    %1222 = vmatpush1.msra.mxu0 %v554
    %1223 = vmatprep.subr.mxu0 %v559
    %1224 = vmatpush1.msra.mxu0 %v558
    %1225 = vmatprep.subr.mxu0 %v563
    %1226 = vmatpush1.msra.mxu0 %v562
    %1227 = vmatprep.subr.mxu0 %v567
    %1228 = vmatpush1.msra.mxu0 %v566
    %1229 = vmatprep.subr.mxu0 %v571
    %1230 = vmatpush1.msra.mxu0 %v570
    %1231 = vmatprep.subr.mxu0 %v575
    %1232 = vmatpush1.msra.mxu0 %v574
    %1233 = vmatprep.subr.mxu0 %v579
    %1234 = vmatpush1.msra.mxu0 %v578
    %1235 = vmatprep.subr.mxu0 %v583
    %1236 = vmatpush1.msra.mxu0 %v582
    %1237 = vmatprep.subr.mxu0 %v587
    %1238 = vmatpush1.msra.mxu0 %v586
    %1239 = vmatprep.subr.mxu0 %v591
    %1240 = vmatpush1.msra.mxu0 %v590
    %1241 = vmatprep.subr.mxu0 %v595
    %1242 = vmatpush1.msra.mxu0 %v594
    %1243 = vmatprep.subr.mxu0 %v599
    %1244 = vmatpush1.msra.mxu0 %v598
    %1245 = vmatprep.subr.mxu0 %v603
    %1246 = vmatpush1.msra.mxu0 %v602
    %1247 = vmatprep.subr.mxu0 %v607
    %1248 = vmatpush1.msra.mxu0 %v606
    %1249 = vmatprep.subr.mxu0 %v611
    %1250 = vmatpush1.msra.mxu0 %v610
    %1251 = vmatprep.subr.mxu0 %v615
    %1252 = vmatpush1.msra.mxu0 %v614
    %1253 = vmatprep.subr.mxu0 %v619
    %1254 = vmatpush1.msra.mxu0 %v618
    %1255 = vmatprep.subr.mxu0 %v623
    %1256 = vmatpush1.msra.mxu0 %v622
    %1257 = vmatprep.subr.mxu0 %v627
    %1258 = vmatpush1.msra.mxu0 %v626
    %1259 = vmatprep.subr.mxu0 %v631
    %1260 = vmatpush1.msra.mxu0 %v630
    %1261 = vmatprep.mubr.f32.mxu0 %v691
    %1262 = vmatmul.mubr.f32.gmra.mrb[0].mxu0 %v689
    %v1263 = vpop.f32.mrb[0].mxu0
    %v1264 = vadd.f32 %v1193, %v1263
    %v1265 = vpop.f32.mrb[0].mxu0
    %v1266 = vadd.f32 %v1195, %v1265
    %1267 = vdwg.mxu0
    %v1268 = vmax.f32 %v980, 0.0
    %v1269 = vmax.f32 %v982, 0.0
    %v1270 = vmax.f32 %v1264, 0.0
    %v1271 = vmax.f32 %v1266, 0.0
    %v1272 = vld [vmem:[#allocation7] sm:$0xff]
    %v1273 = vld [vmem:[#allocation7 + $0x8] sm:$0xff]
    %v1274 = vld [vmem:[#allocation7 + $0x10] sm:$0xff]
    %v1275 = vld [vmem:[#allocation7 + $0x18] sm:$0xff]
    %v1276 = vld [vmem:[#allocation7 + $0x20] sm:$0xff]
    %v1277 = vld [vmem:[#allocation7 + $0x28] sm:$0xff]
    %v1278 = vld [vmem:[#allocation7 + $0x30] sm:$0xff]
    %v1279 = vld [vmem:[#allocation7 + $0x38] sm:$0xff]
    %v1280 = vld [vmem:[#allocation7 + $0x40] sm:$0xff]
    %v1281 = vld [vmem:[#allocation7 + $0x48] sm:$0xff]
    %v1282 = vld [vmem:[#allocation7 + $0x50] sm:$0xff]
    %v1283 = vld [vmem:[#allocation7 + $0x58] sm:$0xff]
    %v1284 = vld [vmem:[#allocation7 + $0x60] sm:$0xff]
    %v1285 = vld [vmem:[#allocation7 + $0x68] sm:$0xff]
    %v1286 = vld [vmem:[#allocation7 + $0x70] sm:$0xff]
    %v1287 = vld [vmem:[#allocation7 + $0x78] sm:$0xff]
    %v1288 = vld [vmem:[#allocation7 + $0x80] sm:$0xff]
    %v1289 = vld [vmem:[#allocation7 + $0x88] sm:$0xff]
    %v1290 = vld [vmem:[#allocation7 + $0x90] sm:$0xff]
    %v1291 = vld [vmem:[#allocation7 + $0x98] sm:$0xff]
    %v1292 = vld [vmem:[#allocation7 + $0xa0] sm:$0xff]
    %v1293 = vld [vmem:[#allocation7 + $0xa8] sm:$0xff]
    %v1294 = vld [vmem:[#allocation7 + $0xb0] sm:$0xff]
    %v1295 = vld [vmem:[#allocation7 + $0xb8] sm:$0xff]
    %v1296 = vld [vmem:[#allocation7 + $0xc0] sm:$0xff]
    %v1297 = vld [vmem:[#allocation7 + $0xc8] sm:$0xff]
    %v1298 = vld [vmem:[#allocation7 + $0xd0] sm:$0xff]
    %v1299 = vld [vmem:[#allocation7 + $0xd8] sm:$0xff]
    %v1300 = vld [vmem:[#allocation7 + $0xe0] sm:$0xff]
    %v1301 = vld [vmem:[#allocation7 + $0xe8] sm:$0xff]
    %v1302 = vld [vmem:[#allocation7 + $0xf0] sm:$0xff]
    %v1303 = vld [vmem:[#allocation7 + $0xf8] sm:$0xff]
    %v1304 = vld [vmem:[#allocation7 + $0x100] sm:$0xff]
    %v1305 = vld [vmem:[#allocation7 + $0x108] sm:$0xff]
    %v1306 = vld [vmem:[#allocation7 + $0x110] sm:$0xff]
    %v1307 = vld [vmem:[#allocation7 + $0x118] sm:$0xff]
    %v1308 = vld [vmem:[#allocation7 + $0x120] sm:$0xff]
    %v1309 = vld [vmem:[#allocation7 + $0x128] sm:$0xff]
    %v1310 = vld [vmem:[#allocation7 + $0x130] sm:$0xff]
    %v1311 = vld [vmem:[#allocation7 + $0x138] sm:$0xff]
    %v1312 = vld [vmem:[#allocation7 + $0x140] sm:$0xff]
    %v1313 = vld [vmem:[#allocation7 + $0x148] sm:$0xff]
    %v1314 = vld [vmem:[#allocation7 + $0x150] sm:$0xff]
    %v1315 = vld [vmem:[#allocation7 + $0x158] sm:$0xff]
    %v1316 = vld [vmem:[#allocation7 + $0x160] sm:$0xff]
    %v1317 = vld [vmem:[#allocation7 + $0x168] sm:$0xff]
    %v1318 = vld [vmem:[#allocation7 + $0x170] sm:$0xff]
    %v1319 = vld [vmem:[#allocation7 + $0x178] sm:$0xff]
    %v1320 = vld [vmem:[#allocation7 + $0x180] sm:$0xff]
    %v1321 = vld [vmem:[#allocation7 + $0x188] sm:$0xff]
    %v1322 = vld [vmem:[#allocation7 + $0x190] sm:$0xff]
    %v1323 = vld [vmem:[#allocation7 + $0x198] sm:$0xff]
    %v1324 = vld [vmem:[#allocation7 + $0x1a0] sm:$0xff]
    %v1325 = vld [vmem:[#allocation7 + $0x1a8] sm:$0xff]
    %v1326 = vld [vmem:[#allocation7 + $0x1b0] sm:$0xff]
    %v1327 = vld [vmem:[#allocation7 + $0x1b8] sm:$0xff]
    %v1328 = vld [vmem:[#allocation7 + $0x1c0] sm:$0xff]
    %v1329 = vld [vmem:[#allocation7 + $0x1c8] sm:$0xff]
    %v1330 = vld [vmem:[#allocation7 + $0x1d0] sm:$0xff]
    %v1331 = vld [vmem:[#allocation7 + $0x1d8] sm:$0xff]
    %v1332 = vld [vmem:[#allocation7 + $0x1e0] sm:$0xff]
    %v1333 = vld [vmem:[#allocation7 + $0x1e8] sm:$0xff]
    %v1334 = vld [vmem:[#allocation7 + $0x1f0] sm:$0xff]
    %v1335 = vld [vmem:[#allocation7 + $0x1f8] sm:$0xff]
    %v1336 = vld [vmem:[#allocation7 + $0x200] sm:$0xff]
    %v1337 = vld [vmem:[#allocation7 + $0x208] sm:$0xff]
    %v1338 = vld [vmem:[#allocation7 + $0x210] sm:$0xff]
    %v1339 = vld [vmem:[#allocation7 + $0x218] sm:$0xff]
    %v1340 = vld [vmem:[#allocation7 + $0x220] sm:$0xff]
    %v1341 = vld [vmem:[#allocation7 + $0x228] sm:$0xff]
    %v1342 = vld [vmem:[#allocation7 + $0x230] sm:$0xff]
    %v1343 = vld [vmem:[#allocation7 + $0x238] sm:$0xff]
    %v1344 = vld [vmem:[#allocation7 + $0x240] sm:$0xff]
    %v1345 = vld [vmem:[#allocation7 + $0x248] sm:$0xff]
    %v1346 = vld [vmem:[#allocation7 + $0x250] sm:$0xff]
    %v1347 = vld [vmem:[#allocation7 + $0x258] sm:$0xff]
    %v1348 = vld [vmem:[#allocation7 + $0x260] sm:$0xff]
    %v1349 = vld [vmem:[#allocation7 + $0x268] sm:$0xff]
    %v1350 = vld [vmem:[#allocation7 + $0x270] sm:$0xff]
    %v1351 = vld [vmem:[#allocation7 + $0x278] sm:$0xff]
    %v1352 = vld [vmem:[#allocation7 + $0x280] sm:$0xff]
    %v1353 = vld [vmem:[#allocation7 + $0x288] sm:$0xff]
    %v1354 = vld [vmem:[#allocation7 + $0x290] sm:$0xff]
    %v1355 = vld [vmem:[#allocation7 + $0x298] sm:$0xff]
    %v1356 = vld [vmem:[#allocation7 + $0x2a0] sm:$0xff]
    %v1357 = vld [vmem:[#allocation7 + $0x2a8] sm:$0xff]
    %v1358 = vld [vmem:[#allocation7 + $0x2b0] sm:$0xff]
    %v1359 = vld [vmem:[#allocation7 + $0x2b8] sm:$0xff]
    %v1360 = vld [vmem:[#allocation7 + $0x2c0] sm:$0xff]
    %v1361 = vld [vmem:[#allocation7 + $0x2c8] sm:$0xff]
    %v1362 = vld [vmem:[#allocation7 + $0x2d0] sm:$0xff]
    %v1363 = vld [vmem:[#allocation7 + $0x2d8] sm:$0xff]
    %v1364 = vld [vmem:[#allocation7 + $0x2e0] sm:$0xff]
    %v1365 = vld [vmem:[#allocation7 + $0x2e8] sm:$0xff]
    %v1366 = vld [vmem:[#allocation7 + $0x2f0] sm:$0xff]
    %v1367 = vld [vmem:[#allocation7 + $0x2f8] sm:$0xff]
    %v1368 = vld [vmem:[#allocation7 + $0x300] sm:$0xff]
    %v1369 = vld [vmem:[#allocation7 + $0x308] sm:$0xff]
    %v1370 = vld [vmem:[#allocation7 + $0x310] sm:$0xff]
    %v1371 = vld [vmem:[#allocation7 + $0x318] sm:$0xff]
    %v1372 = vld [vmem:[#allocation7 + $0x320] sm:$0xff]
    %v1373 = vld [vmem:[#allocation7 + $0x328] sm:$0xff]
    %v1374 = vld [vmem:[#allocation7 + $0x330] sm:$0xff]
    %v1375 = vld [vmem:[#allocation7 + $0x338] sm:$0xff]
    %v1376 = vld [vmem:[#allocation7 + $0x340] sm:$0xff]
    %v1377 = vld [vmem:[#allocation7 + $0x348] sm:$0xff]
    %v1378 = vld [vmem:[#allocation7 + $0x350] sm:$0xff]
    %v1379 = vld [vmem:[#allocation7 + $0x358] sm:$0xff]
    %v1380 = vld [vmem:[#allocation7 + $0x360] sm:$0xff]
    %v1381 = vld [vmem:[#allocation7 + $0x368] sm:$0xff]
    %v1382 = vld [vmem:[#allocation7 + $0x370] sm:$0xff]
    %v1383 = vld [vmem:[#allocation7 + $0x378] sm:$0xff]
    %v1384 = vld [vmem:[#allocation7 + $0x380] sm:$0xff]
    %v1385 = vld [vmem:[#allocation7 + $0x388] sm:$0xff]
    %v1386 = vld [vmem:[#allocation7 + $0x390] sm:$0xff]
    %v1387 = vld [vmem:[#allocation7 + $0x398] sm:$0xff]
    %v1388 = vld [vmem:[#allocation7 + $0x3a0] sm:$0xff]
    %v1389 = vld [vmem:[#allocation7 + $0x3a8] sm:$0xff]
    %v1390 = vld [vmem:[#allocation7 + $0x3b0] sm:$0xff]
    %v1391 = vld [vmem:[#allocation7 + $0x3b8] sm:$0xff]
    %v1392 = vld [vmem:[#allocation7 + $0x3c0] sm:$0xff]
    %v1393 = vld [vmem:[#allocation7 + $0x3c8] sm:$0xff]
    %v1394 = vld [vmem:[#allocation7 + $0x3d0] sm:$0xff]
    %v1395 = vld [vmem:[#allocation7 + $0x3d8] sm:$0xff]
    %v1396 = vld [vmem:[#allocation7 + $0x3e0] sm:$0xff]
    %v1397 = vld [vmem:[#allocation7 + $0x3e8] sm:$0xff]
    %v1398 = vld [vmem:[#allocation7 + $0x3f0] sm:$0xff]
    %v1399 = vld [vmem:[#allocation7 + $0x3f8] sm:$0xff]
    %v1400 = vld [vmem:[#allocation8] sm:$0x3]
    %v1402 = vlaneseq
    %v1403 = vshrl.u32 %v1402, 7
    %v1404 = vsub.s32 0, %v1403
    %v1405 = vrot.slane %v1400, %v1404
    %v1406 = vlaneseq
    %v1407 = vshrl.u32 %v1406, 7
    %v1408 = vsub.s32 1, %v1407
    %v1409 = vrot.slane %v1400, %v1408
    %1412 = vmatprep.subr.mxu0 %v1273
    %1413 = vmatpush1.msra.mxu0 %v1272
    %1414 = vmatprep.subr.mxu0 %v1275
    %1415 = vmatpush1.msra.mxu0 %v1274
    %1416 = vmatprep.subr.mxu0 %v1277
    %1417 = vmatpush1.msra.mxu0 %v1276
    %1418 = vmatprep.subr.mxu0 %v1279
    %1419 = vmatpush1.msra.mxu0 %v1278
    %1420 = vmatprep.subr.mxu0 %v1281
    %1421 = vmatpush1.msra.mxu0 %v1280
    %1422 = vmatprep.subr.mxu0 %v1283
    %1423 = vmatpush1.msra.mxu0 %v1282
    %1424 = vmatprep.subr.mxu0 %v1285
    %1425 = vmatpush1.msra.mxu0 %v1284
    %1426 = vmatprep.subr.mxu0 %v1287
    %1427 = vmatpush1.msra.mxu0 %v1286
    %1428 = vmatprep.subr.mxu0 %v1289
    %1429 = vmatpush1.msra.mxu0 %v1288
    %1430 = vmatprep.subr.mxu0 %v1291
    %1431 = vmatpush1.msra.mxu0 %v1290
    %1432 = vmatprep.subr.mxu0 %v1293
    %1433 = vmatpush1.msra.mxu0 %v1292
    %1434 = vmatprep.subr.mxu0 %v1295
    %1435 = vmatpush1.msra.mxu0 %v1294
    %1436 = vmatprep.subr.mxu0 %v1297
    %1437 = vmatpush1.msra.mxu0 %v1296
    %1438 = vmatprep.subr.mxu0 %v1299
    %1439 = vmatpush1.msra.mxu0 %v1298
    %1440 = vmatprep.subr.mxu0 %v1301
    %1441 = vmatpush1.msra.mxu0 %v1300
    %1442 = vmatprep.subr.mxu0 %v1303
    %1443 = vmatpush1.msra.mxu0 %v1302
    %1444 = vmatprep.subr.mxu0 %v1305
    %1445 = vmatpush1.msra.mxu0 %v1304
    %1446 = vmatprep.subr.mxu0 %v1307
    %1447 = vmatpush1.msra.mxu0 %v1306
    %1448 = vmatprep.subr.mxu0 %v1309
    %1449 = vmatpush1.msra.mxu0 %v1308
    %1450 = vmatprep.subr.mxu0 %v1311
    %1451 = vmatpush1.msra.mxu0 %v1310
    %1452 = vmatprep.subr.mxu0 %v1313
    %1453 = vmatpush1.msra.mxu0 %v1312
    %1454 = vmatprep.subr.mxu0 %v1315
    %1455 = vmatpush1.msra.mxu0 %v1314
    %1456 = vmatprep.subr.mxu0 %v1317
    %1457 = vmatpush1.msra.mxu0 %v1316
    %1458 = vmatprep.subr.mxu0 %v1319
    %1459 = vmatpush1.msra.mxu0 %v1318
    %1460 = vmatprep.subr.mxu0 %v1321
    %1461 = vmatpush1.msra.mxu0 %v1320
    %1462 = vmatprep.subr.mxu0 %v1323
    %1463 = vmatpush1.msra.mxu0 %v1322
    %1464 = vmatprep.subr.mxu0 %v1325
    %1465 = vmatpush1.msra.mxu0 %v1324
    %1466 = vmatprep.subr.mxu0 %v1327
    %1467 = vmatpush1.msra.mxu0 %v1326
    %1468 = vmatprep.subr.mxu0 %v1329
    %1469 = vmatpush1.msra.mxu0 %v1328
    %1470 = vmatprep.subr.mxu0 %v1331
    %1471 = vmatpush1.msra.mxu0 %v1330
    %1472 = vmatprep.subr.mxu0 %v1333
    %1473 = vmatpush1.msra.mxu0 %v1332
    %1474 = vmatprep.subr.mxu0 %v1335
    %1475 = vmatpush1.msra.mxu0 %v1334
    %1476 = vmatprep.mubr.f32.mxu0 %v1269
    %1477 = vmatmul.mubr.f32.gmra.mrb[0].mxu0 %v1268
    %v1478 = vpop.f32.mrb[0].mxu0
    %v1479 = vadd.f32 %v1405, %v1478
    %v1480 = vpop.f32.mrb[0].mxu0
    %v1481 = vadd.f32 %v1409, %v1480
    %1482 = vdwg.mxu0
    %1483 = vmatprep.subr.mxu0 %v1337
    %1484 = vmatpush1.msra.mxu0 %v1336
    %1485 = vmatprep.subr.mxu0 %v1339
    %1486 = vmatpush1.msra.mxu0 %v1338
    %1487 = vmatprep.subr.mxu0 %v1341
    %1488 = vmatpush1.msra.mxu0 %v1340
    %1489 = vmatprep.subr.mxu0 %v1343
    %1490 = vmatpush1.msra.mxu0 %v1342
    %1491 = vmatprep.subr.mxu0 %v1345
    %1492 = vmatpush1.msra.mxu0 %v1344
    %1493 = vmatprep.subr.mxu0 %v1347
    %1494 = vmatpush1.msra.mxu0 %v1346
    %1495 = vmatprep.subr.mxu0 %v1349
    %1496 = vmatpush1.msra.mxu0 %v1348
    %1497 = vmatprep.subr.mxu0 %v1351
    %1498 = vmatpush1.msra.mxu0 %v1350
    %1499 = vmatprep.subr.mxu0 %v1353
    %1500 = vmatpush1.msra.mxu0 %v1352
    %1501 = vmatprep.subr.mxu0 %v1355
    %1502 = vmatpush1.msra.mxu0 %v1354
    %1503 = vmatprep.subr.mxu0 %v1357
    %1504 = vmatpush1.msra.mxu0 %v1356
    %1505 = vmatprep.subr.mxu0 %v1359
    %1506 = vmatpush1.msra.mxu0 %v1358
    %1507 = vmatprep.subr.mxu0 %v1361
    %1508 = vmatpush1.msra.mxu0 %v1360
    %1509 = vmatprep.subr.mxu0 %v1363
    %1510 = vmatpush1.msra.mxu0 %v1362
    %1511 = vmatprep.subr.mxu0 %v1365
    %1512 = vmatpush1.msra.mxu0 %v1364
    %1513 = vmatprep.subr.mxu0 %v1367
    %1514 = vmatpush1.msra.mxu0 %v1366
    %1515 = vmatprep.subr.mxu0 %v1369
    %1516 = vmatpush1.msra.mxu0 %v1368
    %1517 = vmatprep.subr.mxu0 %v1371
    %1518 = vmatpush1.msra.mxu0 %v1370
    %1519 = vmatprep.subr.mxu0 %v1373
    %1520 = vmatpush1.msra.mxu0 %v1372
    %1521 = vmatprep.subr.mxu0 %v1375
    %1522 = vmatpush1.msra.mxu0 %v1374
    %1523 = vmatprep.subr.mxu0 %v1377
    %1524 = vmatpush1.msra.mxu0 %v1376
    %1525 = vmatprep.subr.mxu0 %v1379
    %1526 = vmatpush1.msra.mxu0 %v1378
    %1527 = vmatprep.subr.mxu0 %v1381
    %1528 = vmatpush1.msra.mxu0 %v1380
    %1529 = vmatprep.subr.mxu0 %v1383
    %1530 = vmatpush1.msra.mxu0 %v1382
    %1531 = vmatprep.subr.mxu0 %v1385
    %1532 = vmatpush1.msra.mxu0 %v1384
    %1533 = vmatprep.subr.mxu0 %v1387
    %1534 = vmatpush1.msra.mxu0 %v1386
    %1535 = vmatprep.subr.mxu0 %v1389
    %1536 = vmatpush1.msra.mxu0 %v1388
    %1537 = vmatprep.subr.mxu0 %v1391
    %1538 = vmatpush1.msra.mxu0 %v1390
    %1539 = vmatprep.subr.mxu0 %v1393
    %1540 = vmatpush1.msra.mxu0 %v1392
    %1541 = vmatprep.subr.mxu0 %v1395
    %1542 = vmatpush1.msra.mxu0 %v1394
    %1543 = vmatprep.subr.mxu0 %v1397
    %1544 = vmatpush1.msra.mxu0 %v1396
    %1545 = vmatprep.subr.mxu0 %v1399
    %1546 = vmatpush1.msra.mxu0 %v1398
    %1547 = vmatprep.mubr.f32.mxu0 %v1271
    %1548 = vmatmul.mubr.f32.gmra.mrb[0].mxu0 %v1270
    %v1549 = vpop.f32.mrb[0].mxu0
    %v1550 = vadd.f32 %v1479, %v1549
    %v1551 = vpop.f32.mrb[0].mxu0
    %v1552 = vadd.f32 %v1481, %v1551
    %1553 = vdwg.mxu0
    %v1554 = vmax.f32 %v1550, 0.0
    %v1555 = vmax.f32 %v1552, 0.0
    %v1556 = vld [vmem:[#allocation10] sm:$0xff]
    %v1557 = vld [vmem:[#allocation10 + $0x8] sm:$0xff]
    %v1558 = vld [vmem:[#allocation10 + $0x10] sm:$0xff]
    %v1559 = vld [vmem:[#allocation10 + $0x18] sm:$0xff]
    %v1560 = vld [vmem:[#allocation10 + $0x20] sm:$0xff]
    %v1561 = vld [vmem:[#allocation10 + $0x28] sm:$0xff]
    %v1562 = vld [vmem:[#allocation10 + $0x30] sm:$0xff]
    %v1563 = vld [vmem:[#allocation10 + $0x38] sm:$0xff]
    %v1564 = vld [vmem:[#allocation10 + $0x40] sm:$0xff]
    %v1565 = vld [vmem:[#allocation10 + $0x48] sm:$0xff]
    %v1566 = vld [vmem:[#allocation10 + $0x50] sm:$0xff]
    %v1567 = vld [vmem:[#allocation10 + $0x58] sm:$0xff]
    %v1568 = vld [vmem:[#allocation10 + $0x60] sm:$0xff]
    %v1569 = vld [vmem:[#allocation10 + $0x68] sm:$0xff]
    %v1570 = vld [vmem:[#allocation10 + $0x70] sm:$0xff]
    %v1571 = vld [vmem:[#allocation10 + $0x78] sm:$0xff]
    %v1572 = vld [vmem:[#allocation10 + $0x80] sm:$0xff]
    %v1573 = vld [vmem:[#allocation10 + $0x88] sm:$0xff]
    %v1574 = vld [vmem:[#allocation10 + $0x90] sm:$0xff]
    %v1575 = vld [vmem:[#allocation10 + $0x98] sm:$0xff]
    %v1576 = vld [vmem:[#allocation10 + $0xa0] sm:$0xff]
    %v1577 = vld [vmem:[#allocation10 + $0xa8] sm:$0xff]
    %v1578 = vld [vmem:[#allocation10 + $0xb0] sm:$0xff]
    %v1579 = vld [vmem:[#allocation10 + $0xb8] sm:$0xff]
    %v1580 = vld [vmem:[#allocation10 + $0xc0] sm:$0xff]
    %v1581 = vld [vmem:[#allocation10 + $0xc8] sm:$0xff]
    %v1582 = vld [vmem:[#allocation10 + $0xd0] sm:$0xff]
    %v1583 = vld [vmem:[#allocation10 + $0xd8] sm:$0xff]
    %v1584 = vld [vmem:[#allocation10 + $0xe0] sm:$0xff]
    %v1585 = vld [vmem:[#allocation10 + $0xe8] sm:$0xff]
    %v1586 = vld [vmem:[#allocation10 + $0xf0] sm:$0xff]
    %v1587 = vld [vmem:[#allocation10 + $0xf8] sm:$0xff]
    %v1588 = vld [vmem:[#allocation11] sm:$0x1]
    %v1590 = vlaneseq
    %v1591 = vshrl.u32 %v1590, 7
    %v1592 = vsub.s32 0, %v1591
    %v1593 = vrot.slane %v1588, %v1592
    %1595 = vmatprep.subr.mxu0 0.0
    %1596 = vmatpush1.msra.mxu0 %v1556
    %1597 = vmatprep.subr.mxu0 0.0
    %1598 = vmatpush1.msra.mxu0 %v1557
    %1599 = vmatprep.subr.mxu0 0.0
    %1600 = vmatpush1.msra.mxu0 %v1558
    %1601 = vmatprep.subr.mxu0 0.0
    %1602 = vmatpush1.msra.mxu0 %v1559
    %1603 = vmatprep.subr.mxu0 0.0
    %1604 = vmatpush1.msra.mxu0 %v1560
    %1605 = vmatprep.subr.mxu0 0.0
    %1606 = vmatpush1.msra.mxu0 %v1561
    %1607 = vmatprep.subr.mxu0 0.0
    %1608 = vmatpush1.msra.mxu0 %v1562
    %1609 = vmatprep.subr.mxu0 0.0
    %1610 = vmatpush1.msra.mxu0 %v1563
    %1611 = vmatprep.subr.mxu0 0.0
    %1612 = vmatpush1.msra.mxu0 %v1564
    %1613 = vmatprep.subr.mxu0 0.0
    %1614 = vmatpush1.msra.mxu0 %v1565
    %1615 = vmatprep.subr.mxu0 0.0
    %1616 = vmatpush1.msra.mxu0 %v1566
    %1617 = vmatprep.subr.mxu0 0.0
    %1618 = vmatpush1.msra.mxu0 %v1567
    %1619 = vmatprep.subr.mxu0 0.0
    %1620 = vmatpush1.msra.mxu0 %v1568
    %1621 = vmatprep.subr.mxu0 0.0
    %1622 = vmatpush1.msra.mxu0 %v1569
    %1623 = vmatprep.subr.mxu0 0.0
    %1624 = vmatpush1.msra.mxu0 %v1570
    %1625 = vmatprep.subr.mxu0 0.0
    %1626 = vmatpush1.msra.mxu0 %v1571
    %1627 = vmatprep.subr.mxu0 0.0
    %1628 = vmatpush1.msra.mxu0 %v1572
    %1629 = vmatprep.subr.mxu0 0.0
    %1630 = vmatpush1.msra.mxu0 %v1573
    %1631 = vmatprep.subr.mxu0 0.0
    %1632 = vmatpush1.msra.mxu0 %v1574
    %1633 = vmatprep.subr.mxu0 0.0
    %1634 = vmatpush1.msra.mxu0 %v1575
    %1635 = vmatprep.subr.mxu0 0.0
    %1636 = vmatpush1.msra.mxu0 %v1576
    %1637 = vmatprep.subr.mxu0 0.0
    %1638 = vmatpush1.msra.mxu0 %v1577
    %1639 = vmatprep.subr.mxu0 0.0
    %1640 = vmatpush1.msra.mxu0 %v1578
    %1641 = vmatprep.subr.mxu0 0.0
    %1642 = vmatpush1.msra.mxu0 %v1579
    %1643 = vmatprep.subr.mxu0 0.0
    %1644 = vmatpush1.msra.mxu0 %v1580
    %1645 = vmatprep.subr.mxu0 0.0
    %1646 = vmatpush1.msra.mxu0 %v1581
    %1647 = vmatprep.subr.mxu0 0.0
    %1648 = vmatpush1.msra.mxu0 %v1582
    %1649 = vmatprep.subr.mxu0 0.0
    %1650 = vmatpush1.msra.mxu0 %v1583
    %1651 = vmatprep.subr.mxu0 0.0
    %1652 = vmatpush1.msra.mxu0 %v1584
    %1653 = vmatprep.subr.mxu0 0.0
    %1654 = vmatpush1.msra.mxu0 %v1585
    %1655 = vmatprep.subr.mxu0 0.0
    %1656 = vmatpush1.msra.mxu0 %v1586
    %1657 = vmatprep.subr.mxu0 0.0
    %1658 = vmatpush1.msra.mxu0 %v1587
    %1659 = vmatprep.mubr.f32.mxu0 %v1555
    %1660 = vmatmul.mubr.f32.gmra.mrb[0].mxu0 %v1554
    %v1661 = vpop.f32.mrb[0].mxu0
    %v1662 = vadd.f32 %v1593, %v1661
    %v1663 = vpop.f32.mrb[0].mxu0
    %1664 = vdwg.mxu0
    %v1665 = vmax.f32 %v1662, 0.0
    %v1666 = vld [vmem:[%s7] sm:$0xff]
    %v1667 = vld [vmem:[%s7 + $0x8] sm:$0xff]
    %v1668 = vld [vmem:[%s7 + $0x10] sm:$0xff]
    %v1669 = vld [vmem:[%s7 + $0x18] sm:$0xff]
    %v1670 = vld [vmem:[%s7 + $0x20] sm:$0xff]
    %v1671 = vld [vmem:[%s7 + $0x28] sm:$0xff]
    %v1672 = vld [vmem:[%s7 + $0x30] sm:$0xff]
    %v1673 = vld [vmem:[%s7 + $0x38] sm:$0xff]
    %v1674 = vld [vmem:[%s7 + $0x40] sm:$0xff]
    %v1675 = vld [vmem:[%s7 + $0x48] sm:$0xff]
    %v1676 = vld [vmem:[%s7 + $0x50] sm:$0xff]
    %v1677 = vld [vmem:[%s7 + $0x58] sm:$0xff]
    %v1678 = vld [vmem:[%s7 + $0x60] sm:$0xff]
    %v1679 = vld [vmem:[%s7 + $0x68] sm:$0xff]
    %v1680 = vld [vmem:[%s7 + $0x70] sm:$0xff]
    %v1681 = vld [vmem:[%s7 + $0x78] sm:$0xff]
    %v1682 = vld [vmem:[#allocation13] sm:$0x1]
    %v1684 = vlaneseq
    %v1685 = vshrl.u32 %v1684, 7
    %v1686 = vsub.s32 0, %v1685
    %v1687 = vrot.slane %v1682, %v1686
    %1689 = vmatprep.subr.mxu0 0.0
    %1690 = vmatpush1.msra.mxu0 %v1666
    %1691 = vmatprep.subr.mxu0 0.0
    %1692 = vmatpush1.msra.mxu0 %v1667
    %1693 = vmatprep.subr.mxu0 0.0
    %1694 = vmatpush1.msra.mxu0 %v1668
    %1695 = vmatprep.subr.mxu0 0.0
    %1696 = vmatpush1.msra.mxu0 %v1669
    %1697 = vmatprep.subr.mxu0 0.0
    %1698 = vmatpush1.msra.mxu0 %v1670
    %1699 = vmatprep.subr.mxu0 0.0
    %1700 = vmatpush1.msra.mxu0 %v1671
    %1701 = vmatprep.subr.mxu0 0.0
    %1702 = vmatpush1.msra.mxu0 %v1672
    %1703 = vmatprep.subr.mxu0 0.0
    %1704 = vmatpush1.msra.mxu0 %v1673
    %1705 = vmatprep.subr.mxu0 0.0
    %1706 = vmatpush1.msra.mxu0 %v1674
    %1707 = vmatprep.subr.mxu0 0.0
    %1708 = vmatpush1.msra.mxu0 %v1675
    %1709 = vmatprep.subr.mxu0 0.0
    %1710 = vmatpush1.msra.mxu0 %v1676
    %1711 = vmatprep.subr.mxu0 0.0
    %1712 = vmatpush1.msra.mxu0 %v1677
    %1713 = vmatprep.subr.mxu0 0.0
    %1714 = vmatpush1.msra.mxu0 %v1678
    %1715 = vmatprep.subr.mxu0 0.0
    %1716 = vmatpush1.msra.mxu0 %v1679
    %1717 = vmatprep.subr.mxu0 0.0
    %1718 = vmatpush1.msra.mxu0 %v1680
    %1719 = vmatprep.subr.mxu0 0.0
    %1720 = vmatpush1.msra.mxu0 %v1681
    %1721 = vmatprep.subr.mxu0 0.0
    %1722 = vmatpush1.msra.mxu0 0.0
    %1723 = vmatprep.subr.mxu0 0.0
    %1724 = vmatpush1.msra.mxu0 0.0
    %1725 = vmatprep.subr.mxu0 0.0
    %1726 = vmatpush1.msra.mxu0 0.0
    %1727 = vmatprep.subr.mxu0 0.0
    %1728 = vmatpush1.msra.mxu0 0.0
    %1729 = vmatprep.subr.mxu0 0.0
    %1730 = vmatpush1.msra.mxu0 0.0
    %1731 = vmatprep.subr.mxu0 0.0
    %1732 = vmatpush1.msra.mxu0 0.0
    %1733 = vmatprep.subr.mxu0 0.0
    %1734 = vmatpush1.msra.mxu0 0.0
    %1735 = vmatprep.subr.mxu0 0.0
    %1736 = vmatpush1.msra.mxu0 0.0
    %1737 = vmatprep.subr.mxu0 0.0
    %1738 = vmatpush1.msra.mxu0 0.0
    %1739 = vmatprep.subr.mxu0 0.0
    %1740 = vmatpush1.msra.mxu0 0.0
    %1741 = vmatprep.subr.mxu0 0.0
    %1742 = vmatpush1.msra.mxu0 0.0
    %1743 = vmatprep.subr.mxu0 0.0
    %1744 = vmatpush1.msra.mxu0 0.0
    %1745 = vmatprep.subr.mxu0 0.0
    %1746 = vmatpush1.msra.mxu0 0.0
    %1747 = vmatprep.subr.mxu0 0.0
    %1748 = vmatpush1.msra.mxu0 0.0
    %1749 = vmatprep.subr.mxu0 0.0
    %1750 = vmatpush1.msra.mxu0 0.0
    %1751 = vmatprep.subr.mxu0 0.0
    %1752 = vmatpush1.msra.mxu0 0.0
    %1753 = vmatprep.mubr.f32.mxu0 0.0
    %1754 = vmatmul.mubr.f32.gmra.mrb[0].mxu0 %v1665
    %v1755 = vpop.f32.mrb[0].mxu0
    %v1756 = vadd.f32 %v1687, %v1755
    %v1757 = vpop.f32.mrb[0].mxu0
    %1758 = vdwg.mxu0
    %vm1759 = vcmask 25600
    %v1760 = vsel %vm1759, %v1756, -inf
    %1761 = vmax.xlane.f32.xlu0 %v1760
    %v1762 = vpop.xlane.xlu0 %1761
    %v1763 = vsub.f32 %v1756, %v1762
    %v1764 = vmul.f32 %v1763, 1.442695
    %v1765 = vpow.pop %v1764
    %v1766 = vsel %vm1759, %v1765, 0.0
    %1767 = vadd.xlane.f32.xlu0 %v1766
    %v1768 = vpop.xlane.xlu0 %1767
    %v1769 = vrcp.pop %v1768
    %v1770 = vmul.f32 %v1768, %v1769
    %v1771 = vsub.f32 2.0, %v1770
    %v1772 = vmul.f32 %v1769, %v1771
    %v1773 = vmul.f32 %v1765, %v1772
    %1774 = vst.msk [vmem:[#allocation14] sm:$0x3] %vm1759, %v1773
    // Predicated region
    $region66: #{sac_policy_forward.1} parent=1 // pred_check
      _
    $region67: #{sac_policy_forward.1} parent=1 // pred_check_branch
      %1776 = sbr.rel (0) target = $region69
    $region68: #{sac_policy_forward.1} parent=1 // pred_region
      %s1778 = ssub.s32 32, 32
      %1779 = vsyncadd [#allocation4], %s1778
      %s1781 = sshll.u32 [#allocation14], 4
      %s1782 = int_to_ptr.vmem [resolvable:$true] %s1781
      %1784 = dma.vmem_to_hbm [thread:$0]  %s1782, 32, %s9, [#allocation4]
    $region69: #{sac_policy_forward.1} parent=1 // pred_fallthru
      _
    // Predicated region
    $region70: #{sac_policy_forward.1} parent=1 // pred_check
      _
    $region71: #{sac_policy_forward.1} parent=1 // pred_check_branch
      %1786 = sbr.rel (0) target = $region73
    $region72: #{sac_policy_forward.1} parent=1 // pred_region
      %1787 = dma.done [#allocation4], 32
    $region73: #{sac_policy_forward.1} parent=1 // pred_fallthru
      _
    %1788 = vsyncpa [#allocation3], 1
    %1789 = vsyncpa [#allocation6], 1
    %1790 = vsyncpa [#allocation9], 1
    %1791 = vsyncpa [#allocation12], 1
    %1792 = vsyncpa [#allocation4], 1

</llo_original>
